<compile_context>
chip_gen: v7x
topology: tpu7x:2x2x1
jax: 0.10.0
libtpu: 0.0.40
codegen_flags: <defaults>
</compile_context>

<pallas_src>
import functools

import jax
import jax.numpy as jnp
from jax import lax
from jax.experimental import pallas as pl
from jax.experimental.pallas import tpu as pltpu

_UNROLL = 8  # timesteps unrolled inside each fori_loop iteration


def _round_up(x, m):
    return (x + m - 1) // m * m


def _pad_gate_cols(w, h, h_pad):
    """(in, 4*h) -> (in, 4*h_pad): zero-pad each of the 4 gate blocks (i,f,g,o)."""
    n_in = w.shape[0]
    w4 = w.reshape(n_in, 4, h)
    w4 = jnp.pad(w4, ((0, 0), (0, 0), (0, h_pad - h)))
    return w4.reshape(n_in, 4 * h_pad)


def _sigmoid(x):
    # sigmoid(x) = 0.5*(tanh(x/2)+1): one EUP op + VPU mul/add, no divide.
    return 0.5 * jnp.tanh(0.5 * x) + 0.5


def _lstm_block_kernel(x_ref, wih_ref, whh_ref, bias_ref, len_ref, out_ref,
                       h_sc, c_sc, last_sc, gx_sc,
                       *, block_t, block_b, hidden_pad):
    """One grid step == `block_t` LSTM timesteps for one batch tile.

    grid = (batch_tiles, time_blocks); time is the sequential recurrence
    ("arbitrary", innermost), batch tiles are independent ("parallel").
    """
    H = hidden_pad
    tb = pl.program_id(1)

    @pl.when(tb == 0)
    def _():
        h_sc[...] = jnp.zeros_like(h_sc)
        c_sc[...] = jnp.zeros_like(c_sc)
        last_sc[...] = jnp.zeros_like(last_sc)

    # ---- Block-level input projection: one big MXU pass per grid step.
    # x block is (block_t, block_b, K) f32; collapse leading dims (block_b is a
    # multiple of 8 -> layout no-op), cast to bf16 for the MXU, f32 accumulate.
    x_blk = x_ref[...]
    k_dim = x_blk.shape[-1]
    x2d = x_blk.reshape(block_t * block_b, k_dim).astype(jnp.bfloat16)
    gx_sc[...] = (jnp.dot(x2d, wih_ref[...],
                          preferred_element_type=jnp.float32)
                  + bias_ref[...])                      # (+bias hoisted out of the step loop)

    t0 = tb * block_t
    lm1 = len_ref[...] - 1                              # (block_b, 1) int32, hoisted

    def step(h, c, last, lt):
        row0 = pl.multiple_of(lt * block_b, block_b)
        # Recurrent half: keep W_hh as a ref operand so the RHS stays
        # VMEM-resident instead of being held in vregs across the unroll.
        gates = gx_sc[pl.ds(row0, block_b), :] + jnp.dot(
            h.astype(jnp.bfloat16), whh_ref[...],
            preferred_element_type=jnp.float32)
        # PyTorch gate order i, f, g, o; H multiple of 128 -> whole-vreg slices.
        i_g = _sigmoid(gates[:, 0 * H:1 * H])
        f_g = _sigmoid(gates[:, 1 * H:2 * H])
        g_g = jnp.tanh(gates[:, 2 * H:3 * H])
        o_g = _sigmoid(gates[:, 3 * H:4 * H])
        c_new = f_g * c + i_g * g_g
        h_new = o_g * jnp.tanh(c_new)
        # Capture hidden state at the last *valid* timestep of each sequence.
        last_new = jnp.where(lm1 == (t0 + lt), h_new, last)
        return h_new, c_new, last_new

    def chunk(ci, carry):
        h, c, last = carry
        base = ci * _UNROLL
        for u in range(_UNROLL):                        # bounded unroll (8)
            h, c, last = step(h, c, last, base + u)
        return h, c, last

    h, c, last = lax.fori_loop(0, block_t // _UNROLL, chunk,
                               (h_sc[...], c_sc[...], last_sc[...]))

    # One scratch store per block (not per step).
    h_sc[...] = h
    c_sc[...] = c
    last_sc[...] = last

    @pl.when(tb == pl.num_programs(1) - 1)
    def _():
        out_ref[...] = last.astype(out_ref.dtype)


def dynamic_rnn_forward(x, lengths, params, *, block_t=16, block_b=None):
    """x: (B, T, K) float32 batch-first; lengths: (B,) int; params: dict."""
    B, T, K = x.shape
    H = params["w_hh"].shape[0]

    # TODO(synk): like pack_padded_sequence, lengths must satisfy
    # 1 <= lengths[i] <= T; len==0 / len>T are not checked here.

    # Block sizes: block_b multiple of 8 (f32 sublanes); default = single batch
    # tile for small B (capped at 128 for MXU fill on large B).  On v7x choose
    # block_b <= B_pad/2 explicitly if you want both TensorCores busy.
    if block_b is None:
        block_b = min(_round_up(B, 8), 128)
    block_b = _round_up(max(int(block_b), 8), 8)
    B_pad = _round_up(B, block_b)

    block_t = _round_up(max(int(block_t), _UNROLL), _UNROLL)
    block_t = min(block_t, _round_up(T, _UNROLL))
    T_pad = _round_up(T, block_t)

    H_pad = _round_up(H, 128)          # 128 lanes -> unmasked stores, whole-vreg gates

    # ---- weights: pad gate blocks 4H -> 4*H_pad, cast to bf16 (MXU fast path).
    w_ih = _pad_gate_cols(params["w_ih"], H, H_pad).astype(jnp.bfloat16)      # (K, 4Hp)
    w_hh = _pad_gate_cols(params["w_hh"], H, H_pad)                           # (H, 4Hp)
    w_hh = jnp.pad(w_hh, ((0, H_pad - H), (0, 0))).astype(jnp.bfloat16)       # (Hp, 4Hp)
    bias = _pad_gate_cols((params["b_ih"] + params["b_hh"]).reshape(1, 4 * H),
                          H, H_pad)                                           # (1, 4Hp) f32

    # ---- x: pad (K-wide, ~4H/K cheaper than padding gx) and make time-major.
    # Zero-padded rows/timesteps are never captured, so padding is exact.
    x_p = jnp.pad(x.astype(jnp.float32),
                  ((0, B_pad - B), (0, T_pad - T), (0, 0)))
    x_tm = jnp.transpose(x_p, (1, 0, 2))                                      # (Tp, Bp, K)

    lens2d = jnp.pad(jnp.asarray(lengths, jnp.int32), (0, B_pad - B),
                     constant_values=1).reshape(B_pad, 1)

    kernel = functools.partial(_lstm_block_kernel, block_t=block_t,
                               block_b=block_b, hidden_pad=H_pad)

    n_b = B_pad // block_b
    n_t = T_pad // block_t
    grid_spec = pltpu.PrefetchScalarGridSpec(
        num_scalar_prefetch=0,
        grid=(n_b, n_t),
        in_specs=[
            # x stream: block_t timesteps x block_b rows per grid step.
            pl.BlockSpec((block_t, block_b, K), lambda b, t: (t, b, 0)),
            pl.BlockSpec((K, 4 * H_pad), lambda b, t: (0, 0)),       # W_ih (resident)
            pl.BlockSpec((H_pad, 4 * H_pad), lambda b, t: (0, 0)),   # W_hh (resident)
            pl.BlockSpec((1, 4 * H_pad), lambda b, t: (0, 0)),       # bias (resident)
            pl.BlockSpec((block_b, 1), lambda b, t: (b, 0)),         # lengths
        ],
        out_specs=pl.BlockSpec((block_b, H_pad), lambda b, t: (b, 0)),
        scratch_shapes=[
            pltpu.VMEM((block_b, H_pad), jnp.float32),                    # h
            pltpu.VMEM((block_b, H_pad), jnp.float32),                    # c
            pltpu.VMEM((block_b, H_pad), jnp.float32),                    # last valid h
            pltpu.VMEM((block_t * block_b, 4 * H_pad), jnp.float32),      # block gates_x
        ],
    )

    last_h = pl.pallas_call(
        kernel,
        out_shape=jax.ShapeDtypeStruct((B_pad, H_pad), jnp.float32),
        grid_spec=grid_spec,
        compiler_params=pltpu.CompilerParams(
            dimension_semantics=("parallel", "arbitrary"),
            vmem_limit_bytes=32 * 1024 * 1024),
    )(x_tm, w_ih, w_hh, bias, lens2d)

    # Tiny (H, O) head folded out of the kernel; kernel output is lane-dense.
    return last_h[:B, :H] @ params["w_out"] + params["b_out"]


def ref_forward(x, lengths, params):
    """Pure-JAX reference matching nn.LSTM + gather-last + nn.Linear.

    Mirrors the kernel's bf16 rounding of x / W_ih / W_hh / h (bf16 products are
    exact in f32, so kernel vs. ref differ only by accumulation order).
    """
    B, T, K = x.shape
    H = params["w_hh"].shape[0]
    bf = lambda a: a.astype(jnp.bfloat16).astype(jnp.float32)
    x_r, w_ih, w_hh = bf(x), bf(params["w_ih"]), bf(params["w_hh"])
    bias = params["b_ih"] + params["b_hh"]
    lengths = jnp.asarray(lengths, jnp.int32)
    h = jnp.zeros((B, H), jnp.float32)
    c = jnp.zeros((B, H), jnp.float32)
    last = jnp.zeros((B, H), jnp.float32)
    for t in range(T):
        gates = x_r[:, t] @ w_ih + bf(h) @ w_hh + bias
        i_g = jax.nn.sigmoid(gates[:, 0 * H:1 * H])
        f_g = jax.nn.sigmoid(gates[:, 1 * H:2 * H])
        g_g = jnp.tanh(gates[:, 2 * H:3 * H])
        o_g = jax.nn.sigmoid(gates[:, 3 * H:4 * H])
        c = f_g * c + i_g * g_g
        h = o_g * jnp.tanh(c)
        last = jnp.where((lengths - 1)[:, None] == t, h, last)
    return last @ params["w_out"] + params["b_out"]


def init_params(key, input_dim, hidden_dim, output_dim):
    """Deterministic init matching PyTorch parameter SHAPES (stored transposed)."""
    ks = jax.random.split(key, 6)
    s = 1.0 / jnp.sqrt(hidden_dim)
    return {
        # nn.LSTM weight_ih_l0 is (4H, K); stored as (K, 4H) for row-major matmul
        "w_ih": jax.random.uniform(ks[0], (input_dim, 4 * hidden_dim),
                                   jnp.float32, -s, s),
        "w_hh": jax.random.uniform(ks[1], (hidden_dim, 4 * hidden_dim),
                                   jnp.float32, -s, s),
        "b_ih": jax.random.uniform(ks[2], (4 * hidden_dim,), jnp.float32, -s, s),
        "b_hh": jax.random.uniform(ks[3], (4 * hidden_dim,), jnp.float32, -s, s),
        # nn.Linear weight is (O, H); stored as (H, O)
        "w_out": jax.random.uniform(ks[4], (hidden_dim, output_dim),
                                    jnp.float32, -s, s),
        "b_out": jax.random.uniform(ks[5], (output_dim,), jnp.float32, -s, s),
    }


if __name__ == "__main__":
    key = jax.random.PRNGKey(0)
    k_x, k_p, k_x2, k_p2 = jax.random.split(key, 4)

    # Config 1: shapes implied by the module (B=2, T=8, K=16, H=32, O=8),
    # default blocks -> single batch tile / single time block.
    B, T, K, H, O = 2, 8, 16, 32, 8
    x = jax.random.normal(k_x, (B, T, K), jnp.float32)
    lengths = jnp.array([8, 5], dtype=jnp.int32)   # variable sequence lengths
    params = init_params(k_p, K, H, O)

    out = jax.block_until_ready(dynamic_rnn_forward(x, lengths, params))
    ref = ref_forward(x, lengths, params)
    assert out.shape == (B, O)
    assert jnp.allclose(out, ref, atol=2e-3, rtol=2e-3), (out, ref)

    # Config 2: exercises multiple batch tiles (B=10, block_b=8 -> 2 tiles),
    # multiple time blocks (T=24, block_t=16 -> T_pad=32, 2 blocks, cross-block
    # h/c/last carry) and multiple unroll chunks per block (16/8 = 2).
    B2, T2 = 10, 24
    x2 = jax.random.normal(k_x2, (B2, T2, K), jnp.float32)
    lengths2 = jnp.array([24, 17, 3, 24, 1, 5, 20, 2, 9, 13], dtype=jnp.int32)
    params2 = init_params(k_p2, K, H, O)

    out2 = jax.block_until_ready(
        dynamic_rnn_forward(x2, lengths2, params2, block_t=16, block_b=8))
    ref2 = ref_forward(x2, lengths2, params2)
    assert out2.shape == (B2, O)
    assert jnp.allclose(out2, ref2, atol=2e-3, rtol=2e-3), (out2, ref2)

    print("KERNEL_OK")
</pallas_src>

<mosaic_0001>
module attributes {stable_mosaic.version = 11 : i64} {
  func.func @_lstm_block_kernel(%arg0: i32, %arg1: i32, %arg2: memref<8x8x16xf32, #tpu.memory_space<vmem>>, %arg3: memref<16x512xbf16, #tpu.memory_space<vmem>>, %arg4: memref<128x512xbf16, #tpu.memory_space<vmem>>, %arg5: memref<1x512xf32, #tpu.memory_space<vmem>>, %arg6: memref<8x1xi32, #tpu.memory_space<vmem>>, %arg7: memref<8x128xf32, #tpu.memory_space<vmem>>, %arg8: memref<8x128xf32, #tpu.memory_space<vmem>>, %arg9: memref<8x128xf32, #tpu.memory_space<vmem>>, %arg10: memref<8x128xf32, #tpu.memory_space<vmem>>, %arg11: memref<64x512xf32, #tpu.memory_space<vmem>>) attributes {dimension_semantics = [#tpu.dimension_semantics<parallel>, #tpu.dimension_semantics<arbitrary>], iteration_bounds = array<i64: 1, 1>, scalar_prefetch = 0 : i64, scratch_operands = 4 : i64, tpu.core_type = #tpu.core_type<tc>, window_params = [{transform_indices = @transform_0, window_bounds = array<i64: 8, 8, 16>}, {pipeline_mode = #tpu.pipeline_mode<synchronous>, transform_indices = @transform_1, window_bounds = array<i64: 16, 512>}, {pipeline_mode = #tpu.pipeline_mode<synchronous>, transform_indices = @transform_2, window_bounds = array<i64: 128, 512>}, {pipeline_mode = #tpu.pipeline_mode<synchronous>, transform_indices = @transform_3, window_bounds = array<i64: 1, 512>}, {transform_indices = @transform_4, window_bounds = array<i64: 8, 1>}, {transform_indices = @transform_5, window_bounds = array<i64: 8, 128>}]} {
    %c0_i32 = arith.constant 0 : i32
    %0 = arith.cmpi eq, %arg1, %c0_i32 : i32
    %1 = arith.extui %0 : i1 to i32
    %c0_i32_0 = arith.constant 0 : i32
    %2 = arith.cmpi ne, %1, %c0_i32_0 : i32
    scf.if %2 {
      %cst_142 = arith.constant 0.000000e+00 : f32
      %394 = vector.broadcast %cst_142 : f32 to vector<8x128xf32>
      %c0_143 = arith.constant 0 : index
      %c0_144 = arith.constant 0 : index
      %395 = vector.load %arg8[%c0_143, %c0_144] : memref<8x128xf32, #tpu.memory_space<vmem>>, vector<8x128xf32>
      tpu.vector_store %arg8[%c0_143, %c0_144], %394 {strides = array<i32>} : memref<8x128xf32, #tpu.memory_space<vmem>>, vector<8x128xf32>,
      %cst_145 = arith.constant 0.000000e+00 : f32
      %396 = vector.broadcast %cst_145 : f32 to vector<8x128xf32>
      %c0_146 = arith.constant 0 : index
      %c0_147 = arith.constant 0 : index
      %397 = vector.load %arg9[%c0_146, %c0_147] : memref<8x128xf32, #tpu.memory_space<vmem>>, vector<8x128xf32>
      tpu.vector_store %arg9[%c0_146, %c0_147], %396 {strides = array<i32>} : memref<8x128xf32, #tpu.memory_space<vmem>>, vector<8x128xf32>,
      %cst_148 = arith.constant 0.000000e+00 : f32
      %398 = vector.broadcast %cst_148 : f32 to vector<8x128xf32>
      %c0_149 = arith.constant 0 : index
      %c0_150 = arith.constant 0 : index
      %399 = vector.load %arg10[%c0_149, %c0_150] : memref<8x128xf32, #tpu.memory_space<vmem>>, vector<8x128xf32>
      tpu.vector_store %arg10[%c0_149, %c0_150], %398 {strides = array<i32>} : memref<8x128xf32, #tpu.memory_space<vmem>>, vector<8x128xf32>,
    } else {
    }
    %c0 = arith.constant 0 : index
    %c0_1 = arith.constant 0 : index
    %c0_2 = arith.constant 0 : index
    %3 = vector.load %arg2[%c0, %c0_1, %c0_2] : memref<8x8x16xf32, #tpu.memory_space<vmem>>, vector<8x8x16xf32>
    %4 = vector.shape_cast %3 : vector<8x8x16xf32> to vector<64x16xf32>
    %5 = arith.truncf %4 : vector<64x16xf32> to vector<64x16xbf16>
    %c0_3 = arith.constant 0 : index
    %c0_4 = arith.constant 0 : index
    %6 = vector.load %arg3[%c0_3, %c0_4] : memref<16x512xbf16, #tpu.memory_space<vmem>>, vector<16x512xbf16>
    %cst = arith.constant dense<0.000000e+00> : vector<64x512xf32>
    %7 = tpu.matmul %5, %6, %cst {dimension_numbers = #tpu.dot_dimension_numbers<[1], [0], [0], [1], [0, 0, 1, 1], [], []>} : vector<64x16xbf16>, vector<16x512xbf16>, vector<64x512xf32> -> vector<64x512xf32>
    %c0_5 = arith.constant 0 : index
    %c0_6 = arith.constant 0 : index
    %8 = vector.load %arg5[%c0_5, %c0_6] : memref<1x512xf32, #tpu.memory_space<vmem>>, vector<1x512xf32>
    %9 = vector.broadcast %8 : vector<1x512xf32> to vector<64x512xf32>
    %10 = arith.addf %7, %9 : vector<64x512xf32>
    %c0_7 = arith.constant 0 : index
    %c0_8 = arith.constant 0 : index
    %11 = vector.load %arg11[%c0_7, %c0_8] : memref<64x512xf32, #tpu.memory_space<vmem>>, vector<64x512xf32>
    tpu.vector_store %arg11[%c0_7, %c0_8], %10 {strides = array<i32>} : memref<64x512xf32, #tpu.memory_space<vmem>>, vector<64x512xf32>,
    %c8_i32 = arith.constant 8 : i32
    %12 = arith.muli %arg1, %c8_i32 : i32
    %c0_9 = arith.constant 0 : index
    %c0_10 = arith.constant 0 : index
    %13 = vector.load %arg6[%c0_9, %c0_10] : memref<8x1xi32, #tpu.memory_space<vmem>>, vector<8x1xi32>
    %c1_i32 = arith.constant 1 : i32
    %14 = vector.broadcast %c1_i32 : i32 to vector<8x1xi32>
    %15 = arith.subi %13, %14 : vector<8x1xi32>
    %c0_11 = arith.constant 0 : index
    %c0_12 = arith.constant 0 : index
    %16 = vector.load %arg8[%c0_11, %c0_12] : memref<8x128xf32, #tpu.memory_space<vmem>>, vector<8x128xf32>
    %c0_13 = arith.constant 0 : index
    %c0_14 = arith.constant 0 : index
    %17 = vector.load %arg9[%c0_13, %c0_14] : memref<8x128xf32, #tpu.memory_space<vmem>>, vector<8x128xf32>
    %c0_15 = arith.constant 0 : index
    %c0_16 = arith.constant 0 : index
    %18 = vector.load %arg10[%c0_15, %c0_16] : memref<8x128xf32, #tpu.memory_space<vmem>>, vector<8x128xf32>
    %c0_i32_17 = arith.constant 0 : i32
    %c8_i32_18 = arith.constant 8 : i32
    %19 = arith.muli %c0_i32_17, %c8_i32_18 : i32
    %c0_i32_19 = arith.constant 0 : i32
    %20 = arith.addi %19, %c0_i32_19 : i32
    %c8_i32_20 = arith.constant 8 : i32
    %21 = arith.muli %20, %c8_i32_20 : i32
    %22 = tpu.assume_multiple %21, 8 : i32
    %23 = arith.index_cast %22 : i32 to index
    %c0_21 = arith.constant 0 : index
    %24 = vector.load %arg11[%23, %c0_21] : memref<64x512xf32, #tpu.memory_space<vmem>>, vector<8x512xf32>
    %25 = arith.truncf %16 : vector<8x128xf32> to vector<8x128xbf16>
    %c0_22 = arith.constant 0 : index
    %c0_23 = arith.constant 0 : index
    %26 = vector.load %arg4[%c0_22, %c0_23] : memref<128x512xbf16, #tpu.memory_space<vmem>>, vector<128x512xbf16>
    %cst_24 = arith.constant dense<0.000000e+00> : vector<8x512xf32>
    %27 = tpu.matmul %25, %26, %cst_24 {dimension_numbers = #tpu.dot_dimension_numbers<[1], [0], [0], [1], [0, 0, 1, 1], [], []>} : vector<8x128xbf16>, vector<128x512xbf16>, vector<8x512xf32> -> vector<8x512xf32>
    %28 = arith.addf %24, %27 : vector<8x512xf32>
    %29 = vector.extract_strided_slice %28 {offsets = [0, 0], sizes = [8, 128], strides = [1, 1]} : vector<8x512xf32> to vector<8x128xf32>
    %cst_25 = arith.constant 5.000000e-01 : f32
    %30 = vector.broadcast %cst_25 : f32 to vector<8x128xf32>
    %31 = arith.mulf %30, %29 : vector<8x128xf32>
    %32 = math.tanh %31 : vector<8x128xf32>
    %cst_26 = arith.constant 5.000000e-01 : f32
    %33 = vector.broadcast %cst_26 : f32 to vector<8x128xf32>
    %34 = arith.mulf %33, %32 : vector<8x128xf32>
    %cst_27 = arith.constant 5.000000e-01 : f32
    %35 = vector.broadcast %cst_27 : f32 to vector<8x128xf32>
    %36 = arith.addf %34, %35 : vector<8x128xf32>
    %37 = vector.extract_strided_slice %28 {offsets = [0, 128], sizes = [8, 128], strides = [1, 1]} : vector<8x512xf32> to vector<8x128xf32>
    %cst_28 = arith.constant 5.000000e-01 : f32
    %38 = vector.broadcast %cst_28 : f32 to vector<8x128xf32>
    %39 = arith.mulf %38, %37 : vector<8x128xf32>
    %40 = math.tanh %39 : vector<8x128xf32>
    %cst_29 = arith.constant 5.000000e-01 : f32
    %41 = vector.broadcast %cst_29 : f32 to vector<8x128xf32>
    %42 = arith.mulf %41, %40 : vector<8x128xf32>
    %cst_30 = arith.constant 5.000000e-01 : f32
    %43 = vector.broadcast %cst_30 : f32 to vector<8x128xf32>
    %44 = arith.addf %42, %43 : vector<8x128xf32>
    %45 = vector.extract_strided_slice %28 {offsets = [0, 256], sizes = [8, 128], strides = [1, 1]} : vector<8x512xf32> to vector<8x128xf32>
    %46 = math.tanh %45 : vector<8x128xf32>
    %47 = vector.extract_strided_slice %28 {offsets = [0, 384], sizes = [8, 128], strides = [1, 1]} : vector<8x512xf32> to vector<8x128xf32>
    %cst_31 = arith.constant 5.000000e-01 : f32
    %48 = vector.broadcast %cst_31 : f32 to vector<8x128xf32>
    %49 = arith.mulf %48, %47 : vector<8x128xf32>
    %50 = math.tanh %49 : vector<8x128xf32>
    %cst_32 = arith.constant 5.000000e-01 : f32
    %51 = vector.broadcast %cst_32 : f32 to vector<8x128xf32>
    %52 = arith.mulf %51, %50 : vector<8x128xf32>
    %cst_33 = arith.constant 5.000000e-01 : f32
    %53 = vector.broadcast %cst_33 : f32 to vector<8x128xf32>
    %54 = arith.addf %52, %53 : vector<8x128xf32>
    %55 = arith.mulf %44, %17 : vector<8x128xf32>
    %56 = arith.mulf %36, %46 : vector<8x128xf32>
    %57 = arith.addf %55, %56 : vector<8x128xf32>
    %58 = math.tanh %57 : vector<8x128xf32>
    %59 = arith.mulf %54, %58 : vector<8x128xf32>
    %60 = arith.addi %12, %20 : i32
    %61 = vector.broadcast %60 : i32 to vector<8x1xi32>
    %62 = arith.cmpi eq, %15, %61 : vector<8x1xi32>
    %63 = vector.shape_cast %62 : vector<8x1xi1> to vector<8x1xi1>
    %64 = vector.broadcast %63 : vector<8x1xi1> to vector<8x128xi1>
    %65 = arith.select %64, %59, %18 : vector<8x128xi1>, vector<8x128xf32>
    %c1_i32_34 = arith.constant 1 : i32
    %66 = arith.addi %19, %c1_i32_34 : i32
    %c8_i32_35 = arith.constant 8 : i32
    %67 = arith.muli %66, %c8_i32_35 : i32
    %68 = tpu.assume_multiple %67, 8 : i32
    %69 = arith.index_cast %68 : i32 to index
    %c0_36 = arith.constant 0 : index
    %70 = vector.load %arg11[%69, %c0_36] : memref<64x512xf32, #tpu.memory_space<vmem>>, vector<8x512xf32>
    %71 = arith.truncf %59 : vector<8x128xf32> to vector<8x128xbf16>
    %c0_37 = arith.constant 0 : index
    %c0_38 = arith.constant 0 : index
    %72 = vector.load %arg4[%c0_37, %c0_38] : memref<128x512xbf16, #tpu.memory_space<vmem>>, vector<128x512xbf16>
    %cst_39 = arith.constant dense<0.000000e+00> : vector<8x512xf32>
    %73 = tpu.matmul %71, %72, %cst_39 {dimension_numbers = #tpu.dot_dimension_numbers<[1], [0], [0], [1], [0, 0, 1, 1], [], []>} : vector<8x128xbf16>, vector<128x512xbf16>, vector<8x512xf32> -> vector<8x512xf32>
    %74 = arith.addf %70, %73 : vector<8x512xf32>
    %75 = vector.extract_strided_slice %74 {offsets = [0, 0], sizes = [8, 128], strides = [1, 1]} : vector<8x512xf32> to vector<8x128xf32>
    %cst_40 = arith.constant 5.000000e-01 : f32
    %76 = vector.broadcast %cst_40 : f32 to vector<8x128xf32>
    %77 = arith.mulf %76, %75 : vector<8x128xf32>
    %78 = math.tanh %77 : vector<8x128xf32>
    %cst_41 = arith.constant 5.000000e-01 : f32
    %79 = vector.broadcast %cst_41 : f32 to vector<8x128xf32>
    %80 = arith.mulf %79, %78 : vector<8x128xf32>
    %cst_42 = arith.constant 5.000000e-01 : f32
    %81 = vector.broadcast %cst_42 : f32 to vector<8x128xf32>
    %82 = arith.addf %80, %81 : vector<8x128xf32>
    %83 = vector.extract_strided_slice %74 {offsets = [0, 128], sizes = [8, 128], strides = [1, 1]} : vector<8x512xf32> to vector<8x128xf32>
    %cst_43 = arith.constant 5.000000e-01 : f32
    %84 = vector.broadcast %cst_43 : f32 to vector<8x128xf32>
    %85 = arith.mulf %84, %83 : vector<8x128xf32>
    %86 = math.tanh %85 : vector<8x128xf32>
    %cst_44 = arith.constant 5.000000e-01 : f32
    %87 = vector.broadcast %cst_44 : f32 to vector<8x128xf32>
    %88 = arith.mulf %87, %86 : vector<8x128xf32>
    %cst_45 = arith.constant 5.000000e-01 : f32
    %89 = vector.broadcast %cst_45 : f32 to vector<8x128xf32>
    %90 = arith.addf %88, %89 : vector<8x128xf32>
    %91 = vector.extract_strided_slice %74 {offsets = [0, 256], sizes = [8, 128], strides = [1, 1]} : vector<8x512xf32> to vector<8x128xf32>
    %92 = math.tanh %91 : vector<8x128xf32>
    %93 = vector.extract_strided_slice %74 {offsets = [0, 384], sizes = [8, 128], strides = [1, 1]} : vector<8x512xf32> to vector<8x128xf32>
    %cst_46 = arith.constant 5.000000e-01 : f32
    %94 = vector.broadcast %cst_46 : f32 to vector<8x128xf32>
    %95 = arith.mulf %94, %93 : vector<8x128xf32>
    %96 = math.tanh %95 : vector<8x128xf32>
    %cst_47 = arith.constant 5.000000e-01 : f32
    %97 = vector.broadcast %cst_47 : f32 to vector<8x128xf32>
    %98 = arith.mulf %97, %96 : vector<8x128xf32>
    %cst_48 = arith.constant 5.000000e-01 : f32
    %99 = vector.broadcast %cst_48 : f32 to vector<8x128xf32>
    %100 = arith.addf %98, %99 : vector<8x128xf32>
    %101 = arith.mulf %90, %57 : vector<8x128xf32>
    %102 = arith.mulf %82, %92 : vector<8x128xf32>
    %103 = arith.addf %101, %102 : vector<8x128xf32>
    %104 = math.tanh %103 : vector<8x128xf32>
    %105 = arith.mulf %100, %104 : vector<8x128xf32>
    %106 = arith.addi %12, %66 : i32
    %107 = vector.broadcast %106 : i32 to vector<8x1xi32>
    %108 = arith.cmpi eq, %15, %107 : vector<8x1xi32>
    %109 = vector.shape_cast %108 : vector<8x1xi1> to vector<8x1xi1>
    %110 = vector.broadcast %109 : vector<8x1xi1> to vector<8x128xi1>
    %111 = arith.select %110, %105, %65 : vector<8x128xi1>, vector<8x128xf32>
    %c2_i32 = arith.constant 2 : i32
    %112 = arith.addi %19, %c2_i32 : i32
    %c8_i32_49 = arith.constant 8 : i32
    %113 = arith.muli %112, %c8_i32_49 : i32
    %114 = tpu.assume_multiple %113, 8 : i32
    %115 = arith.index_cast %114 : i32 to index
    %c0_50 = arith.constant 0 : index
    %116 = vector.load %arg11[%115, %c0_50] : memref<64x512xf32, #tpu.memory_space<vmem>>, vector<8x512xf32>
    %117 = arith.truncf %105 : vector<8x128xf32> to vector<8x128xbf16>
    %c0_51 = arith.constant 0 : index
    %c0_52 = arith.constant 0 : index
    %118 = vector.load %arg4[%c0_51, %c0_52] : memref<128x512xbf16, #tpu.memory_space<vmem>>, vector<128x512xbf16>
    %cst_53 = arith.constant dense<0.000000e+00> : vector<8x512xf32>
    %119 = tpu.matmul %117, %118, %cst_53 {dimension_numbers = #tpu.dot_dimension_numbers<[1], [0], [0], [1], [0, 0, 1, 1], [], []>} : vector<8x128xbf16>, vector<128x512xbf16>, vector<8x512xf32> -> vector<8x512xf32>
    %120 = arith.addf %116, %119 : vector<8x512xf32>
    %121 = vector.extract_strided_slice %120 {offsets = [0, 0], sizes = [8, 128], strides = [1, 1]} : vector<8x512xf32> to vector<8x128xf32>
    %cst_54 = arith.constant 5.000000e-01 : f32
    %122 = vector.broadcast %cst_54 : f32 to vector<8x128xf32>
    %123 = arith.mulf %122, %121 : vector<8x128xf32>
    %124 = math.tanh %123 : vector<8x128xf32>
    %cst_55 = arith.constant 5.000000e-01 : f32
    %125 = vector.broadcast %cst_55 : f32 to vector<8x128xf32>
    %126 = arith.mulf %125, %124 : vector<8x128xf32>
    %cst_56 = arith.constant 5.000000e-01 : f32
    %127 = vector.broadcast %cst_56 : f32 to vector<8x128xf32>
    %128 = arith.addf %126, %127 : vector<8x128xf32>
    %129 = vector.extract_strided_slice %120 {offsets = [0, 128], sizes = [8, 128], strides = [1, 1]} : vector<8x512xf32> to vector<8x128xf32>
    %cst_57 = arith.constant 5.000000e-01 : f32
    %130 = vector.broadcast %cst_57 : f32 to vector<8x128xf32>
    %131 = arith.mulf %130, %129 : vector<8x128xf32>
    %132 = math.tanh %131 : vector<8x128xf32>
    %cst_58 = arith.constant 5.000000e-01 : f32
    %133 = vector.broadcast %cst_58 : f32 to vector<8x128xf32>
    %134 = arith.mulf %133, %132 : vector<8x128xf32>
    %cst_59 = arith.constant 5.000000e-01 : f32
    %135 = vector.broadcast %cst_59 : f32 to vector<8x128xf32>
    %136 = arith.addf %134, %135 : vector<8x128xf32>
    %137 = vector.extract_strided_slice %120 {offsets = [0, 256], sizes = [8, 128], strides = [1, 1]} : vector<8x512xf32> to vector<8x128xf32>
    %138 = math.tanh %137 : vector<8x128xf32>
    %139 = vector.extract_strided_slice %120 {offsets = [0, 384], sizes = [8, 128], strides = [1, 1]} : vector<8x512xf32> to vector<8x128xf32>
    %cst_60 = arith.constant 5.000000e-01 : f32
    %140 = vector.broadcast %cst_60 : f32 to vector<8x128xf32>
    %141 = arith.mulf %140, %139 : vector<8x128xf32>
    %142 = math.tanh %141 : vector<8x128xf32>
    %cst_61 = arith.constant 5.000000e-01 : f32
    %143 = vector.broadcast %cst_61 : f32 to vector<8x128xf32>
    %144 = arith.mulf %143, %142 : vector<8x128xf32>
    %cst_62 = arith.constant 5.000000e-01 : f32
    %145 = vector.broadcast %cst_62 : f32 to vector<8x128xf32>
    %146 = arith.addf %144, %145 : vector<8x128xf32>
    %147 = arith.mulf %136, %103 : vector<8x128xf32>
    %148 = arith.mulf %128, %138 : vector<8x128xf32>
    %149 = arith.addf %147, %148 : vector<8x128xf32>
    %150 = math.tanh %149 : vector<8x128xf32>
    %151 = arith.mulf %146, %150 : vector<8x128xf32>
    %152 = arith.addi %12, %112 : i32
    %153 = vector.broadcast %152 : i32 to vector<8x1xi32>
    %154 = arith.cmpi eq, %15, %153 : vector<8x1xi32>
    %155 = vector.shape_cast %154 : vector<8x1xi1> to vector<8x1xi1>
    %156 = vector.broadcast %155 : vector<8x1xi1> to vector<8x128xi1>
    %157 = arith.select %156, %151, %111 : vector<8x128xi1>, vector<8x128xf32>
    %c3_i32 = arith.constant 3 : i32
    %158 = arith.addi %19, %c3_i32 : i32
    %c8_i32_63 = arith.constant 8 : i32
    %159 = arith.muli %158, %c8_i32_63 : i32
    %160 = tpu.assume_multiple %159, 8 : i32
    %161 = arith.index_cast %160 : i32 to index
    %c0_64 = arith.constant 0 : index
    %162 = vector.load %arg11[%161, %c0_64] : memref<64x512xf32, #tpu.memory_space<vmem>>, vector<8x512xf32>
    %163 = arith.truncf %151 : vector<8x128xf32> to vector<8x128xbf16>
    %c0_65 = arith.constant 0 : index
    %c0_66 = arith.constant 0 : index
    %164 = vector.load %arg4[%c0_65, %c0_66] : memref<128x512xbf16, #tpu.memory_space<vmem>>, vector<128x512xbf16>
    %cst_67 = arith.constant dense<0.000000e+00> : vector<8x512xf32>
    %165 = tpu.matmul %163, %164, %cst_67 {dimension_numbers = #tpu.dot_dimension_numbers<[1], [0], [0], [1], [0, 0, 1, 1], [], []>} : vector<8x128xbf16>, vector<128x512xbf16>, vector<8x512xf32> -> vector<8x512xf32>
    %166 = arith.addf %162, %165 : vector<8x512xf32>
    %167 = vector.extract_strided_slice %166 {offsets = [0, 0], sizes = [8, 128], strides = [1, 1]} : vector<8x512xf32> to vector<8x128xf32>
    %cst_68 = arith.constant 5.000000e-01 : f32
    %168 = vector.broadcast %cst_68 : f32 to vector<8x128xf32>
    %169 = arith.mulf %168, %167 : vector<8x128xf32>
    %170 = math.tanh %169 : vector<8x128xf32>
    %cst_69 = arith.constant 5.000000e-01 : f32
    %171 = vector.broadcast %cst_69 : f32 to vector<8x128xf32>
    %172 = arith.mulf %171, %170 : vector<8x128xf32>
    %cst_70 = arith.constant 5.000000e-01 : f32
    %173 = vector.broadcast %cst_70 : f32 to vector<8x128xf32>
    %174 = arith.addf %172, %173 : vector<8x128xf32>
    %175 = vector.extract_strided_slice %166 {offsets = [0, 128], sizes = [8, 128], strides = [1, 1]} : vector<8x512xf32> to vector<8x128xf32>
    %cst_71 = arith.constant 5.000000e-01 : f32
    %176 = vector.broadcast %cst_71 : f32 to vector<8x128xf32>
    %177 = arith.mulf %176, %175 : vector<8x128xf32>
    %178 = math.tanh %177 : vector<8x128xf32>
    %cst_72 = arith.constant 5.000000e-01 : f32
    %179 = vector.broadcast %cst_72 : f32 to vector<8x128xf32>
    %180 = arith.mulf %179, %178 : vector<8x128xf32>
    %cst_73 = arith.constant 5.000000e-01 : f32
    %181 = vector.broadcast %cst_73 : f32 to vector<8x128xf32>
    %182 = arith.addf %180, %181 : vector<8x128xf32>
    %183 = vector.extract_strided_slice %166 {offsets = [0, 256], sizes = [8, 128], strides = [1, 1]} : vector<8x512xf32> to vector<8x128xf32>
    %184 = math.tanh %183 : vector<8x128xf32>
    %185 = vector.extract_strided_slice %166 {offsets = [0, 384], sizes = [8, 128], strides = [1, 1]} : vector<8x512xf32> to vector<8x128xf32>
    %cst_74 = arith.constant 5.000000e-01 : f32
    %186 = vector.broadcast %cst_74 : f32 to vector<8x128xf32>
    %187 = arith.mulf %186, %185 : vector<8x128xf32>
    %188 = math.tanh %187 : vector<8x128xf32>
    %cst_75 = arith.constant 5.000000e-01 : f32
    %189 = vector.broadcast %cst_75 : f32 to vector<8x128xf32>
    %190 = arith.mulf %189, %188 : vector<8x128xf32>
    %cst_76 = arith.constant 5.000000e-01 : f32
    %191 = vector.broadcast %cst_76 : f32 to vector<8x128xf32>
    %192 = arith.addf %190, %191 : vector<8x128xf32>
    %193 = arith.mulf %182, %149 : vector<8x128xf32>
    %194 = arith.mulf %174, %184 : vector<8x128xf32>
    %195 = arith.addf %193, %194 : vector<8x128xf32>
    %196 = math.tanh %195 : vector<8x128xf32>
    %197 = arith.mulf %192, %196 : vector<8x128xf32>
    %198 = arith.addi %12, %158 : i32
    %199 = vector.broadcast %198 : i32 to vector<8x1xi32>
    %200 = arith.cmpi eq, %15, %199 : vector<8x1xi32>
    %201 = vector.shape_cast %200 : vector<8x1xi1> to vector<8x1xi1>
    %202 = vector.broadcast %201 : vector<8x1xi1> to vector<8x128xi1>
    %203 = arith.select %202, %197, %157 : vector<8x128xi1>, vector<8x128xf32>
    %c4_i32 = arith.constant 4 : i32
    %204 = arith.addi %19, %c4_i32 : i32
    %c8_i32_77 = arith.constant 8 : i32
    %205 = arith.muli %204, %c8_i32_77 : i32
    %206 = tpu.assume_multiple %205, 8 : i32
    %207 = arith.index_cast %206 : i32 to index
    %c0_78 = arith.constant 0 : index
    %208 = vector.load %arg11[%207, %c0_78] : memref<64x512xf32, #tpu.memory_space<vmem>>, vector<8x512xf32>
    %209 = arith.truncf %197 : vector<8x128xf32> to vector<8x128xbf16>
    %c0_79 = arith.constant 0 : index
    %c0_80 = arith.constant 0 : index
    %210 = vector.load %arg4[%c0_79, %c0_80] : memref<128x512xbf16, #tpu.memory_space<vmem>>, vector<128x512xbf16>
    %cst_81 = arith.constant dense<0.000000e+00> : vector<8x512xf32>
    %211 = tpu.matmul %209, %210, %cst_81 {dimension_numbers = #tpu.dot_dimension_numbers<[1], [0], [0], [1], [0, 0, 1, 1], [], []>} : vector<8x128xbf16>, vector<128x512xbf16>, vector<8x512xf32> -> vector<8x512xf32>
    %212 = arith.addf %208, %211 : vector<8x512xf32>
    %213 = vector.extract_strided_slice %212 {offsets = [0, 0], sizes = [8, 128], strides = [1, 1]} : vector<8x512xf32> to vector<8x128xf32>
    %cst_82 = arith.constant 5.000000e-01 : f32
    %214 = vector.broadcast %cst_82 : f32 to vector<8x128xf32>
    %215 = arith.mulf %214, %213 : vector<8x128xf32>
    %216 = math.tanh %215 : vector<8x128xf32>
    %cst_83 = arith.constant 5.000000e-01 : f32
    %217 = vector.broadcast %cst_83 : f32 to vector<8x128xf32>
    %218 = arith.mulf %217, %216 : vector<8x128xf32>
    %cst_84 = arith.constant 5.000000e-01 : f32
    %219 = vector.broadcast %cst_84 : f32 to vector<8x128xf32>
    %220 = arith.addf %218, %219 : vector<8x128xf32>
    %221 = vector.extract_strided_slice %212 {offsets = [0, 128], sizes = [8, 128], strides = [1, 1]} : vector<8x512xf32> to vector<8x128xf32>
    %cst_85 = arith.constant 5.000000e-01 : f32
    %222 = vector.broadcast %cst_85 : f32 to vector<8x128xf32>
    %223 = arith.mulf %222, %221 : vector<8x128xf32>
    %224 = math.tanh %223 : vector<8x128xf32>
    %cst_86 = arith.constant 5.000000e-01 : f32
    %225 = vector.broadcast %cst_86 : f32 to vector<8x128xf32>
    %226 = arith.mulf %225, %224 : vector<8x128xf32>
    %cst_87 = arith.constant 5.000000e-01 : f32
    %227 = vector.broadcast %cst_87 : f32 to vector<8x128xf32>
    %228 = arith.addf %226, %227 : vector<8x128xf32>
    %229 = vector.extract_strided_slice %212 {offsets = [0, 256], sizes = [8, 128], strides = [1, 1]} : vector<8x512xf32> to vector<8x128xf32>
    %230 = math.tanh %229 : vector<8x128xf32>
    %231 = vector.extract_strided_slice %212 {offsets = [0, 384], sizes = [8, 128], strides = [1, 1]} : vector<8x512xf32> to vector<8x128xf32>
    %cst_88 = arith.constant 5.000000e-01 : f32
    %232 = vector.broadcast %cst_88 : f32 to vector<8x128xf32>
    %233 = arith.mulf %232, %231 : vector<8x128xf32>
    %234 = math.tanh %233 : vector<8x128xf32>
    %cst_89 = arith.constant 5.000000e-01 : f32
    %235 = vector.broadcast %cst_89 : f32 to vector<8x128xf32>
    %236 = arith.mulf %235, %234 : vector<8x128xf32>
    %cst_90 = arith.constant 5.000000e-01 : f32
    %237 = vector.broadcast %cst_90 : f32 to vector<8x128xf32>
    %238 = arith.addf %236, %237 : vector<8x128xf32>
    %239 = arith.mulf %228, %195 : vector<8x128xf32>
    %240 = arith.mulf %220, %230 : vector<8x128xf32>
    %241 = arith.addf %239, %240 : vector<8x128xf32>
    %242 = math.tanh %241 : vector<8x128xf32>
    %243 = arith.mulf %238, %242 : vector<8x128xf32>
    %244 = arith.addi %12, %204 : i32
    %245 = vector.broadcast %244 : i32 to vector<8x1xi32>
    %246 = arith.cmpi eq, %15, %245 : vector<8x1xi32>
    %247 = vector.shape_cast %246 : vector<8x1xi1> to vector<8x1xi1>
    %248 = vector.broadcast %247 : vector<8x1xi1> to vector<8x128xi1>
    %249 = arith.select %248, %243, %203 : vector<8x128xi1>, vector<8x128xf32>
    %c5_i32 = arith.constant 5 : i32
    %250 = arith.addi %19, %c5_i32 : i32
    %c8_i32_91 = arith.constant 8 : i32
    %251 = arith.muli %250, %c8_i32_91 : i32
    %252 = tpu.assume_multiple %251, 8 : i32
    %253 = arith.index_cast %252 : i32 to index
    %c0_92 = arith.constant 0 : index
    %254 = vector.load %arg11[%253, %c0_92] : memref<64x512xf32, #tpu.memory_space<vmem>>, vector<8x512xf32>
    %255 = arith.truncf %243 : vector<8x128xf32> to vector<8x128xbf16>
    %c0_93 = arith.constant 0 : index
    %c0_94 = arith.constant 0 : index
    %256 = vector.load %arg4[%c0_93, %c0_94] : memref<128x512xbf16, #tpu.memory_space<vmem>>, vector<128x512xbf16>
    %cst_95 = arith.constant dense<0.000000e+00> : vector<8x512xf32>
    %257 = tpu.matmul %255, %256, %cst_95 {dimension_numbers = #tpu.dot_dimension_numbers<[1], [0], [0], [1], [0, 0, 1, 1], [], []>} : vector<8x128xbf16>, vector<128x512xbf16>, vector<8x512xf32> -> vector<8x512xf32>
    %258 = arith.addf %254, %257 : vector<8x512xf32>
    %259 = vector.extract_strided_slice %258 {offsets = [0, 0], sizes = [8, 128], strides = [1, 1]} : vector<8x512xf32> to vector<8x128xf32>
    %cst_96 = arith.constant 5.000000e-01 : f32
    %260 = vector.broadcast %cst_96 : f32 to vector<8x128xf32>
    %261 = arith.mulf %260, %259 : vector<8x128xf32>
    %262 = math.tanh %261 : vector<8x128xf32>
    %cst_97 = arith.constant 5.000000e-01 : f32
    %263 = vector.broadcast %cst_97 : f32 to vector<8x128xf32>
    %264 = arith.mulf %263, %262 : vector<8x128xf32>
    %cst_98 = arith.constant 5.000000e-01 : f32
    %265 = vector.broadcast %cst_98 : f32 to vector<8x128xf32>
    %266 = arith.addf %264, %265 : vector<8x128xf32>
    %267 = vector.extract_strided_slice %258 {offsets = [0, 128], sizes = [8, 128], strides = [1, 1]} : vector<8x512xf32> to vector<8x128xf32>
    %cst_99 = arith.constant 5.000000e-01 : f32
    %268 = vector.broadcast %cst_99 : f32 to vector<8x128xf32>
    %269 = arith.mulf %268, %267 : vector<8x128xf32>
    %270 = math.tanh %269 : vector<8x128xf32>
    %cst_100 = arith.constant 5.000000e-01 : f32
    %271 = vector.broadcast %cst_100 : f32 to vector<8x128xf32>
    %272 = arith.mulf %271, %270 : vector<8x128xf32>
    %cst_101 = arith.constant 5.000000e-01 : f32
    %273 = vector.broadcast %cst_101 : f32 to vector<8x128xf32>
    %274 = arith.addf %272, %273 : vector<8x128xf32>
    %275 = vector.extract_strided_slice %258 {offsets = [0, 256], sizes = [8, 128], strides = [1, 1]} : vector<8x512xf32> to vector<8x128xf32>
    %276 = math.tanh %275 : vector<8x128xf32>
    %277 = vector.extract_strided_slice %258 {offsets = [0, 384], sizes = [8, 128], strides = [1, 1]} : vector<8x512xf32> to vector<8x128xf32>
    %cst_102 = arith.constant 5.000000e-01 : f32
    %278 = vector.broadcast %cst_102 : f32 to vector<8x128xf32>
    %279 = arith.mulf %278, %277 : vector<8x128xf32>
    %280 = math.tanh %279 : vector<8x128xf32>
    %cst_103 = arith.constant 5.000000e-01 : f32
    %281 = vector.broadcast %cst_103 : f32 to vector<8x128xf32>
    %282 = arith.mulf %281, %280 : vector<8x128xf32>
    %cst_104 = arith.constant 5.000000e-01 : f32
    %283 = vector.broadcast %cst_104 : f32 to vector<8x128xf32>
    %284 = arith.addf %282, %283 : vector<8x128xf32>
    %285 = arith.mulf %274, %241 : vector<8x128xf32>
    %286 = arith.mulf %266, %276 : vector<8x128xf32>
    %287 = arith.addf %285, %286 : vector<8x128xf32>
    %288 = math.tanh %287 : vector<8x128xf32>
    %289 = arith.mulf %284, %288 : vector<8x128xf32>
    %290 = arith.addi %12, %250 : i32
    %291 = vector.broadcast %290 : i32 to vector<8x1xi32>
    %292 = arith.cmpi eq, %15, %291 : vector<8x1xi32>
    %293 = vector.shape_cast %292 : vector<8x1xi1> to vector<8x1xi1>
    %294 = vector.broadcast %293 : vector<8x1xi1> to vector<8x128xi1>
    %295 = arith.select %294, %289, %249 : vector<8x128xi1>, vector<8x128xf32>
    %c6_i32 = arith.constant 6 : i32
    %296 = arith.addi %19, %c6_i32 : i32
    %c8_i32_105 = arith.constant 8 : i32
    %297 = arith.muli %296, %c8_i32_105 : i32
    %298 = tpu.assume_multiple %297, 8 : i32
    %299 = arith.index_cast %298 : i32 to index
    %c0_106 = arith.constant 0 : index
    %300 = vector.load %arg11[%299, %c0_106] : memref<64x512xf32, #tpu.memory_space<vmem>>, vector<8x512xf32>
    %301 = arith.truncf %289 : vector<8x128xf32> to vector<8x128xbf16>
    %c0_107 = arith.constant 0 : index
    %c0_108 = arith.constant 0 : index
    %302 = vector.load %arg4[%c0_107, %c0_108] : memref<128x512xbf16, #tpu.memory_space<vmem>>, vector<128x512xbf16>
    %cst_109 = arith.constant dense<0.000000e+00> : vector<8x512xf32>
    %303 = tpu.matmul %301, %302, %cst_109 {dimension_numbers = #tpu.dot_dimension_numbers<[1], [0], [0], [1], [0, 0, 1, 1], [], []>} : vector<8x128xbf16>, vector<128x512xbf16>, vector<8x512xf32> -> vector<8x512xf32>
    %304 = arith.addf %300, %303 : vector<8x512xf32>
    %305 = vector.extract_strided_slice %304 {offsets = [0, 0], sizes = [8, 128], strides = [1, 1]} : vector<8x512xf32> to vector<8x128xf32>
    %cst_110 = arith.constant 5.000000e-01 : f32
    %306 = vector.broadcast %cst_110 : f32 to vector<8x128xf32>
    %307 = arith.mulf %306, %305 : vector<8x128xf32>
    %308 = math.tanh %307 : vector<8x128xf32>
    %cst_111 = arith.constant 5.000000e-01 : f32
    %309 = vector.broadcast %cst_111 : f32 to vector<8x128xf32>
    %310 = arith.mulf %309, %308 : vector<8x128xf32>
    %cst_112 = arith.constant 5.000000e-01 : f32
    %311 = vector.broadcast %cst_112 : f32 to vector<8x128xf32>
    %312 = arith.addf %310, %311 : vector<8x128xf32>
    %313 = vector.extract_strided_slice %304 {offsets = [0, 128], sizes = [8, 128], strides = [1, 1]} : vector<8x512xf32> to vector<8x128xf32>
    %cst_113 = arith.constant 5.000000e-01 : f32
    %314 = vector.broadcast %cst_113 : f32 to vector<8x128xf32>
    %315 = arith.mulf %314, %313 : vector<8x128xf32>
    %316 = math.tanh %315 : vector<8x128xf32>
    %cst_114 = arith.constant 5.000000e-01 : f32
    %317 = vector.broadcast %cst_114 : f32 to vector<8x128xf32>
    %318 = arith.mulf %317, %316 : vector<8x128xf32>
    %cst_115 = arith.constant 5.000000e-01 : f32
    %319 = vector.broadcast %cst_115 : f32 to vector<8x128xf32>
    %320 = arith.addf %318, %319 : vector<8x128xf32>
    %321 = vector.extract_strided_slice %304 {offsets = [0, 256], sizes = [8, 128], strides = [1, 1]} : vector<8x512xf32> to vector<8x128xf32>
    %322 = math.tanh %321 : vector<8x128xf32>
    %323 = vector.extract_strided_slice %304 {offsets = [0, 384], sizes = [8, 128], strides = [1, 1]} : vector<8x512xf32> to vector<8x128xf32>
    %cst_116 = arith.constant 5.000000e-01 : f32
    %324 = vector.broadcast %cst_116 : f32 to vector<8x128xf32>
    %325 = arith.mulf %324, %323 : vector<8x128xf32>
    %326 = math.tanh %325 : vector<8x128xf32>
    %cst_117 = arith.constant 5.000000e-01 : f32
    %327 = vector.broadcast %cst_117 : f32 to vector<8x128xf32>
    %328 = arith.mulf %327, %326 : vector<8x128xf32>
    %cst_118 = arith.constant 5.000000e-01 : f32
    %329 = vector.broadcast %cst_118 : f32 to vector<8x128xf32>
    %330 = arith.addf %328, %329 : vector<8x128xf32>
    %331 = arith.mulf %320, %287 : vector<8x128xf32>
    %332 = arith.mulf %312, %322 : vector<8x128xf32>
    %333 = arith.addf %331, %332 : vector<8x128xf32>
    %334 = math.tanh %333 : vector<8x128xf32>
    %335 = arith.mulf %330, %334 : vector<8x128xf32>
    %336 = arith.addi %12, %296 : i32
    %337 = vector.broadcast %336 : i32 to vector<8x1xi32>
    %338 = arith.cmpi eq, %15, %337 : vector<8x1xi32>
    %339 = vector.shape_cast %338 : vector<8x1xi1> to vector<8x1xi1>
    %340 = vector.broadcast %339 : vector<8x1xi1> to vector<8x128xi1>
    %341 = arith.select %340, %335, %295 : vector<8x128xi1>, vector<8x128xf32>
    %c7_i32 = arith.constant 7 : i32
    %342 = arith.addi %19, %c7_i32 : i32
    %c8_i32_119 = arith.constant 8 : i32
    %343 = arith.muli %342, %c8_i32_119 : i32
    %344 = tpu.assume_multiple %343, 8 : i32
    %345 = arith.index_cast %344 : i32 to index
    %c0_120 = arith.constant 0 : index
    %346 = vector.load %arg11[%345, %c0_120] : memref<64x512xf32, #tpu.memory_space<vmem>>, vector<8x512xf32>
    %347 = arith.truncf %335 : vector<8x128xf32> to vector<8x128xbf16>
    %c0_121 = arith.constant 0 : index
    %c0_122 = arith.constant 0 : index
    %348 = vector.load %arg4[%c0_121, %c0_122] : memref<128x512xbf16, #tpu.memory_space<vmem>>, vector<128x512xbf16>
    %cst_123 = arith.constant dense<0.000000e+00> : vector<8x512xf32>
    %349 = tpu.matmul %347, %348, %cst_123 {dimension_numbers = #tpu.dot_dimension_numbers<[1], [0], [0], [1], [0, 0, 1, 1], [], []>} : vector<8x128xbf16>, vector<128x512xbf16>, vector<8x512xf32> -> vector<8x512xf32>
    %350 = arith.addf %346, %349 : vector<8x512xf32>
    %351 = vector.extract_strided_slice %350 {offsets = [0, 0], sizes = [8, 128], strides = [1, 1]} : vector<8x512xf32> to vector<8x128xf32>
    %cst_124 = arith.constant 5.000000e-01 : f32
    %352 = vector.broadcast %cst_124 : f32 to vector<8x128xf32>
    %353 = arith.mulf %352, %351 : vector<8x128xf32>
    %354 = math.tanh %353 : vector<8x128xf32>
    %cst_125 = arith.constant 5.000000e-01 : f32
    %355 = vector.broadcast %cst_125 : f32 to vector<8x128xf32>
    %356 = arith.mulf %355, %354 : vector<8x128xf32>
    %cst_126 = arith.constant 5.000000e-01 : f32
    %357 = vector.broadcast %cst_126 : f32 to vector<8x128xf32>
    %358 = arith.addf %356, %357 : vector<8x128xf32>
    %359 = vector.extract_strided_slice %350 {offsets = [0, 128], sizes = [8, 128], strides = [1, 1]} : vector<8x512xf32> to vector<8x128xf32>
    %cst_127 = arith.constant 5.000000e-01 : f32
    %360 = vector.broadcast %cst_127 : f32 to vector<8x128xf32>
    %361 = arith.mulf %360, %359 : vector<8x128xf32>
    %362 = math.tanh %361 : vector<8x128xf32>
    %cst_128 = arith.constant 5.000000e-01 : f32
    %363 = vector.broadcast %cst_128 : f32 to vector<8x128xf32>
    %364 = arith.mulf %363, %362 : vector<8x128xf32>
    %cst_129 = arith.constant 5.000000e-01 : f32
    %365 = vector.broadcast %cst_129 : f32 to vector<8x128xf32>
    %366 = arith.addf %364, %365 : vector<8x128xf32>
    %367 = vector.extract_strided_slice %350 {offsets = [0, 256], sizes = [8, 128], strides = [1, 1]} : vector<8x512xf32> to vector<8x128xf32>
    %368 = math.tanh %367 : vector<8x128xf32>
    %369 = vector.extract_strided_slice %350 {offsets = [0, 384], sizes = [8, 128], strides = [1, 1]} : vector<8x512xf32> to vector<8x128xf32>
    %cst_130 = arith.constant 5.000000e-01 : f32
    %370 = vector.broadcast %cst_130 : f32 to vector<8x128xf32>
    %371 = arith.mulf %370, %369 : vector<8x128xf32>
    %372 = math.tanh %371 : vector<8x128xf32>
    %cst_131 = arith.constant 5.000000e-01 : f32
    %373 = vector.broadcast %cst_131 : f32 to vector<8x128xf32>
    %374 = arith.mulf %373, %372 : vector<8x128xf32>
    %cst_132 = arith.constant 5.000000e-01 : f32
    %375 = vector.broadcast %cst_132 : f32 to vector<8x128xf32>
    %376 = arith.addf %374, %375 : vector<8x128xf32>
    %377 = arith.mulf %366, %333 : vector<8x128xf32>
    %378 = arith.mulf %358, %368 : vector<8x128xf32>
    %379 = arith.addf %377, %378 : vector<8x128xf32>
    %380 = math.tanh %379 : vector<8x128xf32>
    %381 = arith.mulf %376, %380 : vector<8x128xf32>
    %382 = arith.addi %12, %342 : i32
    %383 = vector.broadcast %382 : i32 to vector<8x1xi32>
    %384 = arith.cmpi eq, %15, %383 : vector<8x1xi32>
    %385 = vector.shape_cast %384 : vector<8x1xi1> to vector<8x1xi1>
    %386 = vector.broadcast %385 : vector<8x1xi1> to vector<8x128xi1>
    %387 = arith.select %386, %381, %341 : vector<8x128xi1>, vector<8x128xf32>
    %c1_i32_133 = arith.constant 1 : i32
    %c0_134 = arith.constant 0 : index
    %c0_135 = arith.constant 0 : index
    %388 = vector.load %arg8[%c0_134, %c0_135] : memref<8x128xf32, #tpu.memory_space<vmem>>, vector<8x128xf32>
    tpu.vector_store %arg8[%c0_134, %c0_135], %381 {strides = array<i32>} : memref<8x128xf32, #tpu.memory_space<vmem>>, vector<8x128xf32>,
    %c0_136 = arith.constant 0 : index
    %c0_137 = arith.constant 0 : index
    %389 = vector.load %arg9[%c0_136, %c0_137] : memref<8x128xf32, #tpu.memory_space<vmem>>, vector<8x128xf32>
    tpu.vector_store %arg9[%c0_136, %c0_137], %379 {strides = array<i32>} : memref<8x128xf32, #tpu.memory_space<vmem>>, vector<8x128xf32>,
    %c0_138 = arith.constant 0 : index
    %c0_139 = arith.constant 0 : index
    %390 = vector.load %arg10[%c0_138, %c0_139] : memref<8x128xf32, #tpu.memory_space<vmem>>, vector<8x128xf32>
    tpu.vector_store %arg10[%c0_138, %c0_139], %387 {strides = array<i32>} : memref<8x128xf32, #tpu.memory_space<vmem>>, vector<8x128xf32>,
    %c0_i32_140 = arith.constant 0 : i32
    %391 = arith.cmpi eq, %arg1, %c0_i32_140 : i32
    %392 = arith.extui %391 : i1 to i32
    %c0_i32_141 = arith.constant 0 : i32
    %393 = arith.cmpi ne, %392, %c0_i32_141 : i32
    scf.if %393 {
      %c0_142 = arith.constant 0 : index
      %c0_143 = arith.constant 0 : index
      %394 = vector.load %arg7[%c0_142, %c0_143] : memref<8x128xf32, #tpu.memory_space<vmem>>, vector<8x128xf32>
      tpu.vector_store %arg7[%c0_142, %c0_143], %387 {strides = array<i32>} : memref<8x128xf32, #tpu.memory_space<vmem>>, vector<8x128xf32>,
    } else {
    }
    return
  }
  func.func @transform_0(%arg0: i32, %arg1: i32) -> (i32, i32, i32) {
    %c0_i32 = arith.constant 0 : i32
    %c0_i32_0 = arith.constant 0 : i32
    return %arg1, %arg0, %c0_i32 : i32, i32, i32
  }
  func.func @transform_1(%arg0: i32, %arg1: i32) -> (i32, i32) {
    %c0_i32 = arith.constant 0 : i32
    %c0_i32_0 = arith.constant 0 : i32
    %c0_i32_1 = arith.constant 0 : i32
    return %c0_i32, %c0_i32_0 : i32, i32
  }
  func.func @transform_2(%arg0: i32, %arg1: i32) -> (i32, i32) {
    %c0_i32 = arith.constant 0 : i32
    %c0_i32_0 = arith.constant 0 : i32
    %c0_i32_1 = arith.constant 0 : i32
    return %c0_i32, %c0_i32_0 : i32, i32
  }
  func.func @transform_3(%arg0: i32, %arg1: i32) -> (i32, i32) {
    %c0_i32 = arith.constant 0 : i32
    %c0_i32_0 = arith.constant 0 : i32
    %c0_i32_1 = arith.constant 0 : i32
    return %c0_i32, %c0_i32_0 : i32, i32
  }
  func.func @transform_4(%arg0: i32, %arg1: i32) -> (i32, i32) {
    %c0_i32 = arith.constant 0 : i32
    %c0_i32_0 = arith.constant 0 : i32
    return %arg0, %c0_i32 : i32, i32
  }
  func.func @transform_5(%arg0: i32, %arg1: i32) -> (i32, i32) {
    %c0_i32 = arith.constant 0 : i32
    %c0_i32_0 = arith.constant 0 : i32
    return %arg0, %c0_i32 : i32, i32
  }
}

</mosaic_0001>

<llo_original>
// kernel: tpu_custom_call.1
$region0: #{tpu_custom_call.1}
  #allocation0 [shape = 'u32[]', space=smem, size = 0x4, offset = 0x4, fixed_abs, tag = 'smem constant byte address 0x4 - core index']
  #allocation1 [shape = 'u32[144,128]{1,0:T(1,128)}', space=vmem, size = 0x12000, scoped, tag = 'internal scratch']
  #allocation2 [shape = 'f32[8,128]{1,0:T(8,128)}', space=vmem, size = 0x1000, scoped, tag = 'scratch operand']
  #allocation3 [shape = 'f32[8,128]{1,0:T(8,128)}', space=vmem, size = 0x1000, scoped, tag = 'scratch operand']
  #allocation4 [shape = 'f32[8,128]{1,0:T(8,128)}', space=vmem, size = 0x1000, scoped, tag = 'scratch operand']
  #allocation5 [shape = 'f32[64,512]{1,0:T(8,128)}', space=vmem, size = 0x20000, scoped, tag = 'scratch operand']
  %s0 = inlined_call_operand.hbm [shape: f32[8,8,16], index: 0, kind: input, shape index: {}]
  %s1 = inlined_call_operand.hbm [shape: bf16[16,512], index: 1, kind: input, shape index: {}]
  %s2 = inlined_call_operand.hbm [shape: bf16[128,512], index: 2, kind: input, shape index: {}]
  %s3 = inlined_call_operand.vmem [shape: f32[1,512], index: 3, kind: input, shape index: {}]
  %s4 = inlined_call_operand.vmem [shape: s32[8,1], index: 4, kind: input, shape index: {}]
  %s5 = inlined_call_operand.hbm [shape: f32[8,128], index: 5, kind: output, shape index: {}]
  %s6 = sld [smem:[#allocation0]]
  $region50: #{tpu_custom_call.1} parent=0
    _
  %s8 = ssub.s32 1, %s6
  %s9 = scalar_select 0, %s8, %s6
  $region1: #{tpu_custom_call.1} parent=0
    #allocation6 [shape = 'u8[32768]{0}', space=vmem, size = 0x8000, scoped, tag = 'input window, operand 0, single buffered']
    #allocation7 [shape = 's32[1]{0}', space=sflag, size = 0x4, scoped, tag = 'scoped memory for tpu_custom_call.1']
    #allocation8 [shape = 's32[1]{0}', space=sflag, size = 0x4, scoped, tag = 'scoped memory for tpu_custom_call.1']
    #allocation9 [shape = 'u8[16384]{0}', space=vmem, size = 0x4000, scoped, tag = 'input window, operand 1, single buffered']
    #allocation10 [shape = 's32[1]{0}', space=sflag, size = 0x4, scoped, tag = 'scoped memory for tpu_custom_call.1']
    #allocation11 [shape = 'u8[131072]{0}', space=vmem, size = 0x20000, scoped, tag = 'input window, operand 2, single buffered']
    #allocation12 [shape = 'u8[4096]{0}', space=vmem, size = 0x1000, scoped, tag = 'output window, operand 0, single buffered']
    %10 = vsyncpa [#allocation7], 0
    %11 = vsyncpa [#allocation10], 0
    %12 = vsyncpa [#allocation8], 0
    // Predicated region
    $region2: #{tpu_custom_call.1} parent=1 // pred_check
      _
    $region3: #{tpu_custom_call.1} parent=1 // pred_check_branch
      %14 = sbr.rel (0) target = $region5
    $region4: #{tpu_custom_call.1} parent=1 // pred_region
      %s16 = ssub.s32 1024, 1024
      %17 = vsyncadd [#allocation7], %s16
      %s18 = sshll.u32 [#allocation6], 4
      %s19 = int_to_ptr.vmem [resolvable:$true] %s18
      %24 = dma.hbm_to_vmem [thread:$0]  %s0, 1024, %s19, [#allocation7], 128, 128, 8
    $region5: #{tpu_custom_call.1} parent=1 // pred_fallthru
      _
    // Predicated region
    $region6: #{tpu_custom_call.1} parent=1 // pred_check
      _
    $region7: #{tpu_custom_call.1} parent=1 // pred_check_branch
      %26 = sbr.rel (0) target = $region9
    $region8: #{tpu_custom_call.1} parent=1 // pred_region
      %s28 = ssub.s32 512, 512
      %29 = vsyncadd [#allocation10], %s28
      %s30 = sshll.u32 [#allocation9], 4
      %s31 = int_to_ptr.vmem [resolvable:$true] %s30
      %36 = dma.hbm_to_vmem [thread:$0]  %s1, 512, %s31, [#allocation10], 256, 256, 16
    $region9: #{tpu_custom_call.1} parent=1 // pred_fallthru
      _
    // Predicated region
    $region10: #{tpu_custom_call.1} parent=1 // pred_check
      _
    $region11: #{tpu_custom_call.1} parent=1 // pred_check_branch
      %38 = sbr.rel (0) target = $region13
    $region12: #{tpu_custom_call.1} parent=1 // pred_region
      %s40 = ssub.s32 4096, 4096
      %41 = vsyncadd [#allocation10], %s40
      %s42 = sshll.u32 [#allocation11], 4
      %s43 = int_to_ptr.vmem [resolvable:$true] %s42
      %48 = dma.hbm_to_vmem [thread:$0]  %s2, 4096, %s43, [#allocation10], 256, 256, 16
    $region13: #{tpu_custom_call.1} parent=1 // pred_fallthru
      _
    // Predicated region
    $region14: #{tpu_custom_call.1} parent=1 // pred_check
      _
    $region15: #{tpu_custom_call.1} parent=1 // pred_check_branch
      %50 = sbr.rel (0) target = $region17
    $region16: #{tpu_custom_call.1} parent=1 // pred_region
      _
    $region17: #{tpu_custom_call.1} parent=1 // pred_fallthru
      _
    // Predicated region
    $region18: #{tpu_custom_call.1} parent=1 // pred_check
      _
    $region19: #{tpu_custom_call.1} parent=1 // pred_check_branch
      %52 = sbr.rel (0) target = $region21
    $region20: #{tpu_custom_call.1} parent=1 // pred_region
      _
    $region21: #{tpu_custom_call.1} parent=1 // pred_fallthru
      _
    // Predicated region
    $region22: #{tpu_custom_call.1} parent=1 // pred_check
      _
    $region23: #{tpu_custom_call.1} parent=1 // pred_check_branch
      %54 = sbr.rel (0) target = $region25
    $region24: #{tpu_custom_call.1} parent=1 // pred_region
      %55 = dma.done [#allocation7], 1024
    $region25: #{tpu_custom_call.1} parent=1 // pred_fallthru
      _
    // Predicated region
    $region26: #{tpu_custom_call.1} parent=1 // pred_check
      _
    $region27: #{tpu_custom_call.1} parent=1 // pred_check_branch
      %57 = sbr.rel (0) target = $region29
    $region28: #{tpu_custom_call.1} parent=1 // pred_region
      %58 = dma.done [#allocation10], 512
    $region29: #{tpu_custom_call.1} parent=1 // pred_fallthru
      _
    // Predicated region
    $region30: #{tpu_custom_call.1} parent=1 // pred_check
      _
    $region31: #{tpu_custom_call.1} parent=1 // pred_check_branch
      %60 = sbr.rel (0) target = $region33
    $region32: #{tpu_custom_call.1} parent=1 // pred_region
      %61 = dma.done [#allocation10], 4096
    $region33: #{tpu_custom_call.1} parent=1 // pred_fallthru
      _
    %p63 = scmp.eq.s32.totalorder 0, 0
    // Predicated region
    $region34: #{tpu_custom_call.1} parent=1 // pred_check
      %p64 = pneg %p63
    $region35: #{tpu_custom_call.1} parent=1 // pred_check_branch
      %66 = sbr.rel (%p64) target = $region37
    $region36: #{tpu_custom_call.1} parent=1 // pred_region
      %67 = vst [vmem:[#allocation2] sm:$0xff] 0.0
      %68 = vst [vmem:[#allocation3] sm:$0xff] 0.0
      %69 = vst [vmem:[#allocation4] sm:$0xff] 0.0
    $region37: #{tpu_custom_call.1} parent=1 // pred_fallthru
      _
    %v70 = vld [vmem:[#allocation6] sm:$0xff]
    %v71 = vld [vmem:[#allocation6 + $0x8] sm:$0xff]
    %v72 = vld [vmem:[#allocation6 + $0x10] sm:$0xff]
    %v73 = vld [vmem:[#allocation6 + $0x18] sm:$0xff]
    %v74 = vld [vmem:[#allocation6 + $0x20] sm:$0xff]
    %v75 = vld [vmem:[#allocation6 + $0x28] sm:$0xff]
    %v76 = vld [vmem:[#allocation6 + $0x30] sm:$0xff]
    %v77 = vld [vmem:[#allocation6 + $0x38] sm:$0xff]
    %v78 = vpack.c.bf16 %v71, %v70
    %v79 = vpack.c.bf16 %v73, %v72
    %v80 = vpack.c.bf16 %v75, %v74
    %v81 = vpack.c.bf16 %v77, %v76
    %v82 = vld [vmem:[#allocation9] sm:$0xff]
    %v83 = vld [vmem:[#allocation9 + $0x8] sm:$0xff]
    %v84 = vld [vmem:[#allocation9 + $0x10] sm:$0xff]
    %v85 = vld [vmem:[#allocation9 + $0x18] sm:$0xff]
    %v86 = vld [vmem:[%s3] sm:$0xf]
    %v88 = vlaneseq
    %v89 = vshrl.u32 %v88, 7
    %v90 = vsub.s32 0, %v89
    %v91 = vrot.slane %v86, %v90
    %v92 = vlaneseq
    %v93 = vshrl.u32 %v92, 7
    %v94 = vsub.s32 1, %v93
    %v95 = vrot.slane %v86, %v94
    %v96 = vlaneseq
    %v97 = vshrl.u32 %v96, 7
    %v98 = vsub.s32 2, %v97
    %v99 = vrot.slane %v86, %v98
    %v100 = vlaneseq
    %v101 = vshrl.u32 %v100, 7
    %v102 = vsub.s32 3, %v101
    %v103 = vrot.slane %v86, %v102
    %v112 = vunpack.c.l.b16 %v82
    %v113 = vunpack.c.h.b16 %v82
    %v114 = vunpack.c.l.b16 %v83
    %v115 = vunpack.c.h.b16 %v83
    %v116 = vunpack.c.l.b16 %v84
    %v117 = vunpack.c.h.b16 %v84
    %v118 = vunpack.c.l.b16 %v85
    %v119 = vunpack.c.h.b16 %v85
    %v120 = vpack.c.b16 %v116, %v112
    %v121 = vpack.c.b16 %v117, %v113
    %v122 = vpack.c.b16 %v118, %v114
    %v123 = vpack.c.b16 %v119, %v115
    %vm128 = vcmask 130048
    %v130 = vsel %vm128, %v78, 0
    %v133 = vsel %vm128, %v79, 0
    %v136 = vsel %vm128, %v80, 0
    %v139 = vsel %vm128, %v81, 0
    %141 = vmatprep.subr.bf16.mxu0 %v121
    %142 = vmatpush1.bf16.msra.mxu0 %v120
    %143 = vmatprep.subr.bf16.mxu0 0
    %144 = vmatpush1.bf16.msra.mxu0 0
    %145 = vmatprep.subr.bf16.mxu0 0
    %146 = vmatpush1.bf16.msra.mxu0 0
    %147 = vmatprep.subr.bf16.mxu0 0
    %148 = vmatpush1.bf16.msra.mxu0 0
    %149 = vmatprep.subr.bf16.mxu0 0
    %150 = vmatpush1.bf16.msra.mxu0 0
    %151 = vmatprep.subr.bf16.mxu0 0
    %152 = vmatpush1.bf16.msra.mxu0 0
    %153 = vmatprep.subr.bf16.mxu0 0
    %154 = vmatpush1.bf16.msra.mxu0 0
    %155 = vmatprep.subr.bf16.mxu0 0
    %156 = vmatpush1.bf16.msra.mxu0 0
    %157 = vmatprep.subr.bf16.mxu0 0
    %158 = vmatpush1.bf16.msra.mxu0 0
    %159 = vmatprep.subr.bf16.mxu0 0
    %160 = vmatpush1.bf16.msra.mxu0 0
    %161 = vmatprep.subr.bf16.mxu0 0
    %162 = vmatpush1.bf16.msra.mxu0 0
    %163 = vmatprep.subr.bf16.mxu0 0
    %164 = vmatpush1.bf16.msra.mxu0 0
    %165 = vmatprep.subr.bf16.mxu0 0
    %166 = vmatpush1.bf16.msra.mxu0 0
    %167 = vmatprep.subr.bf16.mxu0 0
    %168 = vmatpush1.bf16.msra.mxu0 0
    %169 = vmatprep.subr.bf16.mxu0 0
    %170 = vmatpush1.bf16.msra.mxu0 0
    %171 = vmatprep.subr.bf16.mxu0 0
    %172 = vmatpush1.bf16.msra.mxu0 0
    %173 = vmatprep.mubr.bf16.mxu0 0
    %174 = vmatmul.mubr.bf16.gmra.mrb[0].mxu0 %v130
    %v175 = vpop.f32.mrb[0].mxu0
    %v176 = vadd.f32 %v91, %v175
    %v177 = vpop.f32.mrb[0].mxu0
    %v178 = vadd.f32 %v95, %v177
    %v179 = vpop.f32.mrb[0].mxu0
    %v180 = vadd.f32 %v91, %v179
    %v181 = vpop.f32.mrb[0].mxu0
    %v182 = vadd.f32 %v95, %v181
    %183 = vmatprep.mubr.bf16.mxu0 0
    %184 = vmatmul.mubr.bf16.gmra.mrb[0].mxu0 %v133
    %v185 = vpop.f32.mrb[0].mxu0
    %v186 = vadd.f32 %v91, %v185
    %v187 = vpop.f32.mrb[0].mxu0
    %v188 = vadd.f32 %v95, %v187
    %v189 = vpop.f32.mrb[0].mxu0
    %v190 = vadd.f32 %v91, %v189
    %v191 = vpop.f32.mrb[0].mxu0
    %v192 = vadd.f32 %v95, %v191
    %193 = vmatprep.mubr.bf16.mxu0 0
    %194 = vmatmul.mubr.bf16.gmra.mrb[0].mxu0 %v136
    %v195 = vpop.f32.mrb[0].mxu0
    %v196 = vadd.f32 %v91, %v195
    %v197 = vpop.f32.mrb[0].mxu0
    %v198 = vadd.f32 %v95, %v197
    %v199 = vpop.f32.mrb[0].mxu0
    %v200 = vadd.f32 %v91, %v199
    %v201 = vpop.f32.mrb[0].mxu0
    %v202 = vadd.f32 %v95, %v201
    %203 = vmatprep.mubr.bf16.mxu0 0
    %204 = vmatmul.mubr.bf16.gmra.mrb[0].mxu0 %v139
    %v205 = vpop.f32.mrb[0].mxu0
    %v206 = vadd.f32 %v91, %v205
    %v207 = vpop.f32.mrb[0].mxu0
    %v208 = vadd.f32 %v95, %v207
    %v209 = vpop.f32.mrb[0].mxu0
    %v210 = vadd.f32 %v91, %v209
    %v211 = vpop.f32.mrb[0].mxu0
    %v212 = vadd.f32 %v95, %v211
    %213 = vdwg.mxu0
    %214 = vmatprep.subr.bf16.mxu0 %v123
    %215 = vmatpush1.bf16.msra.mxu0 %v122
    %216 = vmatprep.subr.bf16.mxu0 0
    %217 = vmatpush1.bf16.msra.mxu0 0
    %218 = vmatprep.subr.bf16.mxu0 0
    %219 = vmatpush1.bf16.msra.mxu0 0
    %220 = vmatprep.subr.bf16.mxu0 0
    %221 = vmatpush1.bf16.msra.mxu0 0
    %222 = vmatprep.subr.bf16.mxu0 0
    %223 = vmatpush1.bf16.msra.mxu0 0
    %224 = vmatprep.subr.bf16.mxu0 0
    %225 = vmatpush1.bf16.msra.mxu0 0
    %226 = vmatprep.subr.bf16.mxu0 0
    %227 = vmatpush1.bf16.msra.mxu0 0
    %228 = vmatprep.subr.bf16.mxu0 0
    %229 = vmatpush1.bf16.msra.mxu0 0
    %230 = vmatprep.subr.bf16.mxu0 0
    %231 = vmatpush1.bf16.msra.mxu0 0
    %232 = vmatprep.subr.bf16.mxu0 0
    %233 = vmatpush1.bf16.msra.mxu0 0
    %234 = vmatprep.subr.bf16.mxu0 0
    %235 = vmatpush1.bf16.msra.mxu0 0
    %236 = vmatprep.subr.bf16.mxu0 0
    %237 = vmatpush1.bf16.msra.mxu0 0
    %238 = vmatprep.subr.bf16.mxu0 0
    %239 = vmatpush1.bf16.msra.mxu0 0
    %240 = vmatprep.subr.bf16.mxu0 0
    %241 = vmatpush1.bf16.msra.mxu0 0
    %242 = vmatprep.subr.bf16.mxu0 0
    %243 = vmatpush1.bf16.msra.mxu0 0
    %244 = vmatprep.subr.bf16.mxu0 0
    %245 = vmatpush1.bf16.msra.mxu0 0
    %246 = vmatprep.mubr.bf16.mxu0 0
    %247 = vmatmul.mubr.bf16.gmra.mrb[0].mxu0 %v130
    %v248 = vpop.f32.mrb[0].mxu0
    %v249 = vadd.f32 %v99, %v248
    %v250 = vpop.f32.mrb[0].mxu0
    %v251 = vadd.f32 %v103, %v250
    %v252 = vpop.f32.mrb[0].mxu0
    %v253 = vadd.f32 %v99, %v252
    %v254 = vpop.f32.mrb[0].mxu0
    %v255 = vadd.f32 %v103, %v254
    %256 = vmatprep.mubr.bf16.mxu0 0
    %257 = vmatmul.mubr.bf16.gmra.mrb[0].mxu0 %v133
    %v258 = vpop.f32.mrb[0].mxu0
    %v259 = vadd.f32 %v99, %v258
    %v260 = vpop.f32.mrb[0].mxu0
    %v261 = vadd.f32 %v103, %v260
    %v262 = vpop.f32.mrb[0].mxu0
    %v263 = vadd.f32 %v99, %v262
    %v264 = vpop.f32.mrb[0].mxu0
    %v265 = vadd.f32 %v103, %v264
    %266 = vmatprep.mubr.bf16.mxu0 0
    %267 = vmatmul.mubr.bf16.gmra.mrb[0].mxu0 %v136
    %v268 = vpop.f32.mrb[0].mxu0
    %v269 = vadd.f32 %v99, %v268
    %v270 = vpop.f32.mrb[0].mxu0
    %v271 = vadd.f32 %v103, %v270
    %v272 = vpop.f32.mrb[0].mxu0
    %v273 = vadd.f32 %v99, %v272
    %v274 = vpop.f32.mrb[0].mxu0
    %v275 = vadd.f32 %v103, %v274
    %276 = vmatprep.mubr.bf16.mxu0 0
    %277 = vmatmul.mubr.bf16.gmra.mrb[0].mxu0 %v139
    %v278 = vpop.f32.mrb[0].mxu0
    %v279 = vadd.f32 %v99, %v278
    %v280 = vpop.f32.mrb[0].mxu0
    %v281 = vadd.f32 %v103, %v280
    %v282 = vpop.f32.mrb[0].mxu0
    %v283 = vadd.f32 %v99, %v282
    %v284 = vpop.f32.mrb[0].mxu0
    %v285 = vadd.f32 %v103, %v284
    %286 = vdwg.mxu0
    %287 = vst [vmem:[#allocation5] sm:$0xff] %v176
    %288 = vst [vmem:[#allocation5 + $0x8] sm:$0xff] %v178
    %289 = vst [vmem:[#allocation5 + $0x10] sm:$0xff] %v249
    %290 = vst [vmem:[#allocation5 + $0x18] sm:$0xff] %v251
    %291 = vst [vmem:[#allocation5 + $0x20] sm:$0xff] %v180
    %292 = vst [vmem:[#allocation5 + $0x28] sm:$0xff] %v182
    %293 = vst [vmem:[#allocation5 + $0x30] sm:$0xff] %v253
    %294 = vst [vmem:[#allocation5 + $0x38] sm:$0xff] %v255
    %295 = vst [vmem:[#allocation5 + $0x40] sm:$0xff] %v186
    %296 = vst [vmem:[#allocation5 + $0x48] sm:$0xff] %v188
    %297 = vst [vmem:[#allocation5 + $0x50] sm:$0xff] %v259
    %298 = vst [vmem:[#allocation5 + $0x58] sm:$0xff] %v261
    %299 = vst [vmem:[#allocation5 + $0x60] sm:$0xff] %v190
    %300 = vst [vmem:[#allocation5 + $0x68] sm:$0xff] %v192
    %301 = vst [vmem:[#allocation5 + $0x70] sm:$0xff] %v263
    %302 = vst [vmem:[#allocation5 + $0x78] sm:$0xff] %v265
    %303 = vst [vmem:[#allocation5 + $0x80] sm:$0xff] %v196
    %304 = vst [vmem:[#allocation5 + $0x88] sm:$0xff] %v198
    %305 = vst [vmem:[#allocation5 + $0x90] sm:$0xff] %v269
    %306 = vst [vmem:[#allocation5 + $0x98] sm:$0xff] %v271
    %307 = vst [vmem:[#allocation5 + $0xa0] sm:$0xff] %v200
    %308 = vst [vmem:[#allocation5 + $0xa8] sm:$0xff] %v202
    %309 = vst [vmem:[#allocation5 + $0xb0] sm:$0xff] %v273
    %310 = vst [vmem:[#allocation5 + $0xb8] sm:$0xff] %v275
    %311 = vst [vmem:[#allocation5 + $0xc0] sm:$0xff] %v206
    %312 = vst [vmem:[#allocation5 + $0xc8] sm:$0xff] %v208
    %313 = vst [vmem:[#allocation5 + $0xd0] sm:$0xff] %v279
    %314 = vst [vmem:[#allocation5 + $0xd8] sm:$0xff] %v281
    %315 = vst [vmem:[#allocation5 + $0xe0] sm:$0xff] %v210
    %316 = vst [vmem:[#allocation5 + $0xe8] sm:$0xff] %v212
    %317 = vst [vmem:[#allocation5 + $0xf0] sm:$0xff] %v283
    %318 = vst [vmem:[#allocation5 + $0xf8] sm:$0xff] %v285
    %s319 = smul.u32 0, 8
    %v320 = vld [vmem:[%s4] sm:$0xff]
    %v321 = vsub.s32 %v320, 1
    %v322 = vld [vmem:[#allocation2] sm:$0xff]
    %v323 = vld [vmem:[#allocation3] sm:$0xff]
    %v324 = vld [vmem:[#allocation4] sm:$0xff]
    %s325 = smul.u32 0, 4
    %s326 = smul.addr %s325, 8
    %s327 = scalar_lea.vmem [#allocation5], %s326
    %v328 = vld [vmem:[%s327] sm:$0xff]
    %v329 = vld [vmem:[%s327 + $0x8] sm:$0xff]
    %v330 = vld [vmem:[%s327 + $0x10] sm:$0xff]
    %v331 = vld [vmem:[%s327 + $0x18] sm:$0xff]
    %v332 = vpack.c.bf16 %v322, %v322
    %v333 = vld [vmem:[#allocation11] sm:$0xff]
    %v334 = vld [vmem:[#allocation11 + $0x8] sm:$0xff]
    %v335 = vld [vmem:[#allocation11 + $0x10] sm:$0xff]
    %v336 = vld [vmem:[#allocation11 + $0x18] sm:$0xff]
    %v337 = vld [vmem:[#allocation11 + $0x20] sm:$0xff]
    %v338 = vld [vmem:[#allocation11 + $0x28] sm:$0xff]
    %v339 = vld [vmem:[#allocation11 + $0x30] sm:$0xff]
    %v340 = vld [vmem:[#allocation11 + $0x38] sm:$0xff]
    %v341 = vld [vmem:[#allocation11 + $0x40] sm:$0xff]
    %v342 = vld [vmem:[#allocation11 + $0x48] sm:$0xff]
    %v343 = vld [vmem:[#allocation11 + $0x50] sm:$0xff]
    %v344 = vld [vmem:[#allocation11 + $0x58] sm:$0xff]
    %v345 = vld [vmem:[#allocation11 + $0x60] sm:$0xff]
    %v346 = vld [vmem:[#allocation11 + $0x68] sm:$0xff]
    %v347 = vld [vmem:[#allocation11 + $0x70] sm:$0xff]
    %v348 = vld [vmem:[#allocation11 + $0x78] sm:$0xff]
    %v349 = vld [vmem:[#allocation11 + $0x80] sm:$0xff]
    %v350 = vld [vmem:[#allocation11 + $0x88] sm:$0xff]
    %v351 = vld [vmem:[#allocation11 + $0x90] sm:$0xff]
    %v352 = vld [vmem:[#allocation11 + $0x98] sm:$0xff]
    %v353 = vld [vmem:[#allocation11 + $0xa0] sm:$0xff]
    %v354 = vld [vmem:[#allocation11 + $0xa8] sm:$0xff]
    %v355 = vld [vmem:[#allocation11 + $0xb0] sm:$0xff]
    %v356 = vld [vmem:[#allocation11 + $0xb8] sm:$0xff]
    %v357 = vld [vmem:[#allocation11 + $0xc0] sm:$0xff]
    %v358 = vld [vmem:[#allocation11 + $0xc8] sm:$0xff]
    %v359 = vld [vmem:[#allocation11 + $0xd0] sm:$0xff]
    %v360 = vld [vmem:[#allocation11 + $0xd8] sm:$0xff]
    %v361 = vld [vmem:[#allocation11 + $0xe0] sm:$0xff]
    %v362 = vld [vmem:[#allocation11 + $0xe8] sm:$0xff]
    %v363 = vld [vmem:[#allocation11 + $0xf0] sm:$0xff]
    %v364 = vld [vmem:[#allocation11 + $0xf8] sm:$0xff]
    %v397 = vunpack.c.l.b16 %v333
    %v398 = vunpack.c.h.b16 %v333
    %v399 = vunpack.c.l.b16 %v334
    %v400 = vunpack.c.h.b16 %v334
    %v401 = vunpack.c.l.b16 %v335
    %v402 = vunpack.c.h.b16 %v335
    %v403 = vunpack.c.l.b16 %v336
    %v404 = vunpack.c.h.b16 %v336
    %v405 = vunpack.c.l.b16 %v337
    %v406 = vunpack.c.h.b16 %v337
    %v407 = vunpack.c.l.b16 %v338
    %v408 = vunpack.c.h.b16 %v338
    %v409 = vunpack.c.l.b16 %v339
    %v410 = vunpack.c.h.b16 %v339
    %v411 = vunpack.c.l.b16 %v340
    %v412 = vunpack.c.h.b16 %v340
    %v413 = vunpack.c.l.b16 %v341
    %v414 = vunpack.c.h.b16 %v341
    %v415 = vunpack.c.l.b16 %v342
    %v416 = vunpack.c.h.b16 %v342
    %v417 = vunpack.c.l.b16 %v343
    %v418 = vunpack.c.h.b16 %v343
    %v419 = vunpack.c.l.b16 %v344
    %v420 = vunpack.c.h.b16 %v344
    %v421 = vunpack.c.l.b16 %v345
    %v422 = vunpack.c.h.b16 %v345
    %v423 = vunpack.c.l.b16 %v346
    %v424 = vunpack.c.h.b16 %v346
    %v425 = vunpack.c.l.b16 %v347
    %v426 = vunpack.c.h.b16 %v347
    %v427 = vunpack.c.l.b16 %v348
    %v428 = vunpack.c.h.b16 %v348
    %v429 = vunpack.c.l.b16 %v349
    %v430 = vunpack.c.h.b16 %v349
    %v431 = vunpack.c.l.b16 %v350
    %v432 = vunpack.c.h.b16 %v350
    %v433 = vunpack.c.l.b16 %v351
    %v434 = vunpack.c.h.b16 %v351
    %v435 = vunpack.c.l.b16 %v352
    %v436 = vunpack.c.h.b16 %v352
    %v437 = vunpack.c.l.b16 %v353
    %v438 = vunpack.c.h.b16 %v353
    %v439 = vunpack.c.l.b16 %v354
    %v440 = vunpack.c.h.b16 %v354
    %v441 = vunpack.c.l.b16 %v355
    %v442 = vunpack.c.h.b16 %v355
    %v443 = vunpack.c.l.b16 %v356
    %v444 = vunpack.c.h.b16 %v356
    %v445 = vunpack.c.l.b16 %v357
    %v446 = vunpack.c.h.b16 %v357
    %v447 = vunpack.c.l.b16 %v358
    %v448 = vunpack.c.h.b16 %v358
    %v449 = vunpack.c.l.b16 %v359
    %v450 = vunpack.c.h.b16 %v359
    %v451 = vunpack.c.l.b16 %v360
    %v452 = vunpack.c.h.b16 %v360
    %v453 = vunpack.c.l.b16 %v361
    %v454 = vunpack.c.h.b16 %v361
    %v455 = vunpack.c.l.b16 %v362
    %v456 = vunpack.c.h.b16 %v362
    %v457 = vunpack.c.l.b16 %v363
    %v458 = vunpack.c.h.b16 %v363
    %v459 = vunpack.c.l.b16 %v364
    %v460 = vunpack.c.h.b16 %v364
    %v461 = vpack.c.b16 %v401, %v397
    %v462 = vpack.c.b16 %v402, %v398
    %v463 = vpack.c.b16 %v403, %v399
    %v464 = vpack.c.b16 %v404, %v400
    %v465 = vpack.c.b16 %v409, %v405
    %v466 = vpack.c.b16 %v410, %v406
    %v467 = vpack.c.b16 %v411, %v407
    %v468 = vpack.c.b16 %v412, %v408
    %v469 = vpack.c.b16 %v417, %v413
    %v470 = vpack.c.b16 %v418, %v414
    %v471 = vpack.c.b16 %v419, %v415
    %v472 = vpack.c.b16 %v420, %v416
    %v473 = vpack.c.b16 %v425, %v421
    %v474 = vpack.c.b16 %v426, %v422
    %v475 = vpack.c.b16 %v427, %v423
    %v476 = vpack.c.b16 %v428, %v424
    %v477 = vpack.c.b16 %v433, %v429
    %v478 = vpack.c.b16 %v434, %v430
    %v479 = vpack.c.b16 %v435, %v431
    %v480 = vpack.c.b16 %v436, %v432
    %v481 = vpack.c.b16 %v441, %v437
    %v482 = vpack.c.b16 %v442, %v438
    %v483 = vpack.c.b16 %v443, %v439
    %v484 = vpack.c.b16 %v444, %v440
    %v485 = vpack.c.b16 %v449, %v445
    %v486 = vpack.c.b16 %v450, %v446
    %v487 = vpack.c.b16 %v451, %v447
    %v488 = vpack.c.b16 %v452, %v448
    %v489 = vpack.c.b16 %v457, %v453
    %v490 = vpack.c.b16 %v458, %v454
    %v491 = vpack.c.b16 %v459, %v455
    %v492 = vpack.c.b16 %v460, %v456
    %525 = vmatprep.subr.bf16.mxu0 %v462
    %526 = vmatpush1.bf16.msra.mxu0 %v461
    %527 = vmatprep.subr.bf16.mxu0 %v466
    %528 = vmatpush1.bf16.msra.mxu0 %v465
    %529 = vmatprep.subr.bf16.mxu0 %v470
    %530 = vmatpush1.bf16.msra.mxu0 %v469
    %531 = vmatprep.subr.bf16.mxu0 %v474
    %532 = vmatpush1.bf16.msra.mxu0 %v473
    %533 = vmatprep.subr.bf16.mxu0 %v478
    %534 = vmatpush1.bf16.msra.mxu0 %v477
    %535 = vmatprep.subr.bf16.mxu0 %v482
    %536 = vmatpush1.bf16.msra.mxu0 %v481
    %537 = vmatprep.subr.bf16.mxu0 %v486
    %538 = vmatpush1.bf16.msra.mxu0 %v485
    %539 = vmatprep.subr.bf16.mxu0 %v490
    %540 = vmatpush1.bf16.msra.mxu0 %v489
    %541 = vmatprep.subr.bf16.mxu0 0
    %542 = vmatpush1.bf16.msra.mxu0 0
    %543 = vmatprep.subr.bf16.mxu0 0
    %544 = vmatpush1.bf16.msra.mxu0 0
    %545 = vmatprep.subr.bf16.mxu0 0
    %546 = vmatpush1.bf16.msra.mxu0 0
    %547 = vmatprep.subr.bf16.mxu0 0
    %548 = vmatpush1.bf16.msra.mxu0 0
    %549 = vmatprep.subr.bf16.mxu0 0
    %550 = vmatpush1.bf16.msra.mxu0 0
    %551 = vmatprep.subr.bf16.mxu0 0
    %552 = vmatpush1.bf16.msra.mxu0 0
    %553 = vmatprep.subr.bf16.mxu0 0
    %554 = vmatpush1.bf16.msra.mxu0 0
    %555 = vmatprep.subr.bf16.mxu0 0
    %556 = vmatpush1.bf16.msra.mxu0 0
    %557 = vmatprep.mubr.bf16.mxu0 0
    %558 = vmatmul.mubr.bf16.gmra.mrb[0].mxu0 %v332
    %v559 = vpop.f32.mrb[0].mxu0
    %v560 = vadd.f32 0.0, %v559
    %v561 = vpop.f32.mrb[0].mxu0
    %v562 = vadd.f32 0.0, %v561
    %v563 = vpop.f32.mrb[0].mxu0
    %v564 = vpop.f32.mrb[0].mxu0
    %565 = vdwg.mxu0
    %566 = vmatprep.subr.bf16.mxu0 %v464
    %567 = vmatpush1.bf16.msra.mxu0 %v463
    %568 = vmatprep.subr.bf16.mxu0 %v468
    %569 = vmatpush1.bf16.msra.mxu0 %v467
    %570 = vmatprep.subr.bf16.mxu0 %v472
    %571 = vmatpush1.bf16.msra.mxu0 %v471
    %572 = vmatprep.subr.bf16.mxu0 %v476
    %573 = vmatpush1.bf16.msra.mxu0 %v475
    %574 = vmatprep.subr.bf16.mxu0 %v480
    %575 = vmatpush1.bf16.msra.mxu0 %v479
    %576 = vmatprep.subr.bf16.mxu0 %v484
    %577 = vmatpush1.bf16.msra.mxu0 %v483
    %578 = vmatprep.subr.bf16.mxu0 %v488
    %579 = vmatpush1.bf16.msra.mxu0 %v487
    %580 = vmatprep.subr.bf16.mxu0 %v492
    %581 = vmatpush1.bf16.msra.mxu0 %v491
    %582 = vmatprep.subr.bf16.mxu0 0
    %583 = vmatpush1.bf16.msra.mxu0 0
    %584 = vmatprep.subr.bf16.mxu0 0
    %585 = vmatpush1.bf16.msra.mxu0 0
    %586 = vmatprep.subr.bf16.mxu0 0
    %587 = vmatpush1.bf16.msra.mxu0 0
    %588 = vmatprep.subr.bf16.mxu0 0
    %589 = vmatpush1.bf16.msra.mxu0 0
    %590 = vmatprep.subr.bf16.mxu0 0
    %591 = vmatpush1.bf16.msra.mxu0 0
    %592 = vmatprep.subr.bf16.mxu0 0
    %593 = vmatpush1.bf16.msra.mxu0 0
    %594 = vmatprep.subr.bf16.mxu0 0
    %595 = vmatpush1.bf16.msra.mxu0 0
    %596 = vmatprep.subr.bf16.mxu0 0
    %597 = vmatpush1.bf16.msra.mxu0 0
    %598 = vmatprep.mubr.bf16.mxu0 0
    %599 = vmatmul.mubr.bf16.gmra.mrb[0].mxu0 %v332
    %v600 = vpop.f32.mrb[0].mxu0
    %v601 = vadd.f32 0.0, %v600
    %v602 = vpop.f32.mrb[0].mxu0
    %v603 = vadd.f32 0.0, %v602
    %v604 = vpop.f32.mrb[0].mxu0
    %v605 = vpop.f32.mrb[0].mxu0
    %606 = vdwg.mxu0
    %v607 = vadd.f32 %v328, %v560
    %v608 = vadd.f32 %v329, %v562
    %v609 = vadd.f32 %v330, %v601
    %v610 = vadd.f32 %v331, %v603
    %v611 = vmul.f32 %v607, 0.5
    %v612 = vtanh.pop %v611
    %v613 = vmul.f32 %v612, 0.5
    %v614 = vadd.f32 %v613, 0.5
    %v615 = vmul.f32 %v608, 0.5
    %v616 = vtanh.pop %v615
    %v617 = vmul.f32 %v616, 0.5
    %v618 = vadd.f32 %v617, 0.5
    %v619 = vtanh.pop %v609
    %v620 = vmul.f32 %v610, 0.5
    %v621 = vtanh.pop %v620
    %v622 = vmul.f32 %v621, 0.5
    %v623 = vadd.f32 %v622, 0.5
    %v624 = vmul.f32 %v618, %v323
    %v625 = vmul.f32 %v614, %v619
    %v626 = vadd.f32 %v624, %v625
    %v627 = vtanh.pop %v626
    %v628 = vmul.f32 %v623, %v627
    %v629 = vstv %s319
    %vm630 = vcmp.eq.s32.totalorder %v321, %v629
    %v631 = vsel %vm630, 1, 0
    %632 = vset.pattern.permute.xlu0 0
    %633 = vperm.xlu0 %632, %v631
    %v634 = vpop.permute.xlu0 %633
    %vm635 = vcmp.eq.s32.totalorder %v634, 1
    %v636 = vsel %vm635, %v628, %v324
    %s637 = smul.u32 1, 4
    %s638 = smul.addr %s637, 8
    %s639 = scalar_lea.vmem [#allocation5], %s638
    %v640 = vld [vmem:[%s639] sm:$0xff]
    %v641 = vld [vmem:[%s639 + $0x8] sm:$0xff]
    %v642 = vld [vmem:[%s639 + $0x10] sm:$0xff]
    %v643 = vld [vmem:[%s639 + $0x18] sm:$0xff]
    %v644 = vpack.c.bf16 %v628, %v628
    %645 = vmatprep.subr.bf16.mxu0 %v462
    %646 = vmatpush1.bf16.msra.mxu0 %v461
    %647 = vmatprep.subr.bf16.mxu0 %v466
    %648 = vmatpush1.bf16.msra.mxu0 %v465
    %649 = vmatprep.subr.bf16.mxu0 %v470
    %650 = vmatpush1.bf16.msra.mxu0 %v469
    %651 = vmatprep.subr.bf16.mxu0 %v474
    %652 = vmatpush1.bf16.msra.mxu0 %v473
    %653 = vmatprep.subr.bf16.mxu0 %v478
    %654 = vmatpush1.bf16.msra.mxu0 %v477
    %655 = vmatprep.subr.bf16.mxu0 %v482
    %656 = vmatpush1.bf16.msra.mxu0 %v481
    %657 = vmatprep.subr.bf16.mxu0 %v486
    %658 = vmatpush1.bf16.msra.mxu0 %v485
    %659 = vmatprep.subr.bf16.mxu0 %v490
    %660 = vmatpush1.bf16.msra.mxu0 %v489
    %661 = vmatprep.subr.bf16.mxu0 0
    %662 = vmatpush1.bf16.msra.mxu0 0
    %663 = vmatprep.subr.bf16.mxu0 0
    %664 = vmatpush1.bf16.msra.mxu0 0
    %665 = vmatprep.subr.bf16.mxu0 0
    %666 = vmatpush1.bf16.msra.mxu0 0
    %667 = vmatprep.subr.bf16.mxu0 0
    %668 = vmatpush1.bf16.msra.mxu0 0
    %669 = vmatprep.subr.bf16.mxu0 0
    %670 = vmatpush1.bf16.msra.mxu0 0
    %671 = vmatprep.subr.bf16.mxu0 0
    %672 = vmatpush1.bf16.msra.mxu0 0
    %673 = vmatprep.subr.bf16.mxu0 0
    %674 = vmatpush1.bf16.msra.mxu0 0
    %675 = vmatprep.subr.bf16.mxu0 0
    %676 = vmatpush1.bf16.msra.mxu0 0
    %677 = vmatprep.mubr.bf16.mxu0 0
    %678 = vmatmul.mubr.bf16.gmra.mrb[0].mxu0 %v644
    %v679 = vpop.f32.mrb[0].mxu0
    %v680 = vadd.f32 0.0, %v679
    %v681 = vpop.f32.mrb[0].mxu0
    %v682 = vadd.f32 0.0, %v681
    %v683 = vpop.f32.mrb[0].mxu0
    %v684 = vpop.f32.mrb[0].mxu0
    %685 = vdwg.mxu0
    %686 = vmatprep.subr.bf16.mxu0 %v464
    %687 = vmatpush1.bf16.msra.mxu0 %v463
    %688 = vmatprep.subr.bf16.mxu0 %v468
    %689 = vmatpush1.bf16.msra.mxu0 %v467
    %690 = vmatprep.subr.bf16.mxu0 %v472
    %691 = vmatpush1.bf16.msra.mxu0 %v471
    %692 = vmatprep.subr.bf16.mxu0 %v476
    %693 = vmatpush1.bf16.msra.mxu0 %v475
    %694 = vmatprep.subr.bf16.mxu0 %v480
    %695 = vmatpush1.bf16.msra.mxu0 %v479
    %696 = vmatprep.subr.bf16.mxu0 %v484
    %697 = vmatpush1.bf16.msra.mxu0 %v483
    %698 = vmatprep.subr.bf16.mxu0 %v488
    %699 = vmatpush1.bf16.msra.mxu0 %v487
    %700 = vmatprep.subr.bf16.mxu0 %v492
    %701 = vmatpush1.bf16.msra.mxu0 %v491
    %702 = vmatprep.subr.bf16.mxu0 0
    %703 = vmatpush1.bf16.msra.mxu0 0
    %704 = vmatprep.subr.bf16.mxu0 0
    %705 = vmatpush1.bf16.msra.mxu0 0
    %706 = vmatprep.subr.bf16.mxu0 0
    %707 = vmatpush1.bf16.msra.mxu0 0
    %708 = vmatprep.subr.bf16.mxu0 0
    %709 = vmatpush1.bf16.msra.mxu0 0
    %710 = vmatprep.subr.bf16.mxu0 0
    %711 = vmatpush1.bf16.msra.mxu0 0
    %712 = vmatprep.subr.bf16.mxu0 0
    %713 = vmatpush1.bf16.msra.mxu0 0
    %714 = vmatprep.subr.bf16.mxu0 0
    %715 = vmatpush1.bf16.msra.mxu0 0
    %716 = vmatprep.subr.bf16.mxu0 0
    %717 = vmatpush1.bf16.msra.mxu0 0
    %718 = vmatprep.mubr.bf16.mxu0 0
    %719 = vmatmul.mubr.bf16.gmra.mrb[0].mxu0 %v644
    %v720 = vpop.f32.mrb[0].mxu0
    %v721 = vadd.f32 0.0, %v720
    %v722 = vpop.f32.mrb[0].mxu0
    %v723 = vadd.f32 0.0, %v722
    %v724 = vpop.f32.mrb[0].mxu0
    %v725 = vpop.f32.mrb[0].mxu0
    %726 = vdwg.mxu0
    %v727 = vadd.f32 %v640, %v680
    %v728 = vadd.f32 %v641, %v682
    %v729 = vadd.f32 %v642, %v721
    %v730 = vadd.f32 %v643, %v723
    %v731 = vmul.f32 %v727, 0.5
    %v732 = vtanh.pop %v731
    %v733 = vmul.f32 %v732, 0.5
    %v734 = vadd.f32 %v733, 0.5
    %v735 = vmul.f32 %v728, 0.5
    %v736 = vtanh.pop %v735
    %v737 = vmul.f32 %v736, 0.5
    %v738 = vadd.f32 %v737, 0.5
    %v739 = vtanh.pop %v729
    %v740 = vmul.f32 %v730, 0.5
    %v741 = vtanh.pop %v740
    %v742 = vmul.f32 %v741, 0.5
    %v743 = vadd.f32 %v742, 0.5
    %v744 = vmul.f32 %v738, %v626
    %v745 = vmul.f32 %v734, %v739
    %v746 = vadd.f32 %v744, %v745
    %v747 = vtanh.pop %v746
    %v748 = vmul.f32 %v743, %v747
    %s749 = sadd.s32 %s319, 1
    %v750 = vstv %s749
    %vm751 = vcmp.eq.s32.totalorder %v321, %v750
    %v752 = vsel %vm751, 1, 0
    %753 = vset.pattern.permute.xlu0 0
    %754 = vperm.xlu0 %753, %v752
    %v755 = vpop.permute.xlu0 %754
    %vm756 = vcmp.eq.s32.totalorder %v755, 1
    %v757 = vsel %vm756, %v748, %v636
    %s758 = smul.u32 2, 4
    %s759 = smul.addr %s758, 8
    %s760 = scalar_lea.vmem [#allocation5], %s759
    %v761 = vld [vmem:[%s760] sm:$0xff]
    %v762 = vld [vmem:[%s760 + $0x8] sm:$0xff]
    %v763 = vld [vmem:[%s760 + $0x10] sm:$0xff]
    %v764 = vld [vmem:[%s760 + $0x18] sm:$0xff]
    %v765 = vpack.c.bf16 %v748, %v748
    %766 = vmatprep.subr.bf16.mxu0 %v462
    %767 = vmatpush1.bf16.msra.mxu0 %v461
    %768 = vmatprep.subr.bf16.mxu0 %v466
    %769 = vmatpush1.bf16.msra.mxu0 %v465
    %770 = vmatprep.subr.bf16.mxu0 %v470
    %771 = vmatpush1.bf16.msra.mxu0 %v469
    %772 = vmatprep.subr.bf16.mxu0 %v474
    %773 = vmatpush1.bf16.msra.mxu0 %v473
    %774 = vmatprep.subr.bf16.mxu0 %v478
    %775 = vmatpush1.bf16.msra.mxu0 %v477
    %776 = vmatprep.subr.bf16.mxu0 %v482
    %777 = vmatpush1.bf16.msra.mxu0 %v481
    %778 = vmatprep.subr.bf16.mxu0 %v486
    %779 = vmatpush1.bf16.msra.mxu0 %v485
    %780 = vmatprep.subr.bf16.mxu0 %v490
    %781 = vmatpush1.bf16.msra.mxu0 %v489
    %782 = vmatprep.subr.bf16.mxu0 0
    %783 = vmatpush1.bf16.msra.mxu0 0
    %784 = vmatprep.subr.bf16.mxu0 0
    %785 = vmatpush1.bf16.msra.mxu0 0
    %786 = vmatprep.subr.bf16.mxu0 0
    %787 = vmatpush1.bf16.msra.mxu0 0
    %788 = vmatprep.subr.bf16.mxu0 0
    %789 = vmatpush1.bf16.msra.mxu0 0
    %790 = vmatprep.subr.bf16.mxu0 0
    %791 = vmatpush1.bf16.msra.mxu0 0
    %792 = vmatprep.subr.bf16.mxu0 0
    %793 = vmatpush1.bf16.msra.mxu0 0
    %794 = vmatprep.subr.bf16.mxu0 0
    %795 = vmatpush1.bf16.msra.mxu0 0
    %796 = vmatprep.subr.bf16.mxu0 0
    %797 = vmatpush1.bf16.msra.mxu0 0
    %798 = vmatprep.mubr.bf16.mxu0 0
    %799 = vmatmul.mubr.bf16.gmra.mrb[0].mxu0 %v765
    %v800 = vpop.f32.mrb[0].mxu0
    %v801 = vadd.f32 0.0, %v800
    %v802 = vpop.f32.mrb[0].mxu0
    %v803 = vadd.f32 0.0, %v802
    %v804 = vpop.f32.mrb[0].mxu0
    %v805 = vpop.f32.mrb[0].mxu0
    %806 = vdwg.mxu0
    %807 = vmatprep.subr.bf16.mxu0 %v464
    %808 = vmatpush1.bf16.msra.mxu0 %v463
    %809 = vmatprep.subr.bf16.mxu0 %v468
    %810 = vmatpush1.bf16.msra.mxu0 %v467
    %811 = vmatprep.subr.bf16.mxu0 %v472
    %812 = vmatpush1.bf16.msra.mxu0 %v471
    %813 = vmatprep.subr.bf16.mxu0 %v476
    %814 = vmatpush1.bf16.msra.mxu0 %v475
    %815 = vmatprep.subr.bf16.mxu0 %v480
    %816 = vmatpush1.bf16.msra.mxu0 %v479
    %817 = vmatprep.subr.bf16.mxu0 %v484
    %818 = vmatpush1.bf16.msra.mxu0 %v483
    %819 = vmatprep.subr.bf16.mxu0 %v488
    %820 = vmatpush1.bf16.msra.mxu0 %v487
    %821 = vmatprep.subr.bf16.mxu0 %v492
    %822 = vmatpush1.bf16.msra.mxu0 %v491
    %823 = vmatprep.subr.bf16.mxu0 0
    %824 = vmatpush1.bf16.msra.mxu0 0
    %825 = vmatprep.subr.bf16.mxu0 0
    %826 = vmatpush1.bf16.msra.mxu0 0
    %827 = vmatprep.subr.bf16.mxu0 0
    %828 = vmatpush1.bf16.msra.mxu0 0
    %829 = vmatprep.subr.bf16.mxu0 0
    %830 = vmatpush1.bf16.msra.mxu0 0
    %831 = vmatprep.subr.bf16.mxu0 0
    %832 = vmatpush1.bf16.msra.mxu0 0
    %833 = vmatprep.subr.bf16.mxu0 0
    %834 = vmatpush1.bf16.msra.mxu0 0
    %835 = vmatprep.subr.bf16.mxu0 0
    %836 = vmatpush1.bf16.msra.mxu0 0
    %837 = vmatprep.subr.bf16.mxu0 0
    %838 = vmatpush1.bf16.msra.mxu0 0
    %839 = vmatprep.mubr.bf16.mxu0 0
    %840 = vmatmul.mubr.bf16.gmra.mrb[0].mxu0 %v765
    %v841 = vpop.f32.mrb[0].mxu0
    %v842 = vadd.f32 0.0, %v841
    %v843 = vpop.f32.mrb[0].mxu0
    %v844 = vadd.f32 0.0, %v843
    %v845 = vpop.f32.mrb[0].mxu0
    %v846 = vpop.f32.mrb[0].mxu0
    %847 = vdwg.mxu0
    %v848 = vadd.f32 %v761, %v801
    %v849 = vadd.f32 %v762, %v803
    %v850 = vadd.f32 %v763, %v842
    %v851 = vadd.f32 %v764, %v844
    %v852 = vmul.f32 %v848, 0.5
    %v853 = vtanh.pop %v852
    %v854 = vmul.f32 %v853, 0.5
    %v855 = vadd.f32 %v854, 0.5
    %v856 = vmul.f32 %v849, 0.5
    %v857 = vtanh.pop %v856
    %v858 = vmul.f32 %v857, 0.5
    %v859 = vadd.f32 %v858, 0.5
    %v860 = vtanh.pop %v850
    %v861 = vmul.f32 %v851, 0.5
    %v862 = vtanh.pop %v861
    %v863 = vmul.f32 %v862, 0.5
    %v864 = vadd.f32 %v863, 0.5
    %v865 = vmul.f32 %v859, %v746
    %v866 = vmul.f32 %v855, %v860
    %v867 = vadd.f32 %v865, %v866
    %v868 = vtanh.pop %v867
    %v869 = vmul.f32 %v864, %v868
    %s870 = sadd.s32 %s319, 2
    %v871 = vstv %s870
    %vm872 = vcmp.eq.s32.totalorder %v321, %v871
    %v873 = vsel %vm872, 1, 0
    %874 = vset.pattern.permute.xlu0 0
    %875 = vperm.xlu0 %874, %v873
    %v876 = vpop.permute.xlu0 %875
    %vm877 = vcmp.eq.s32.totalorder %v876, 1
    %v878 = vsel %vm877, %v869, %v757
    %s879 = smul.u32 3, 4
    %s880 = smul.addr %s879, 8
    %s881 = scalar_lea.vmem [#allocation5], %s880
    %v882 = vld [vmem:[%s881] sm:$0xff]
    %v883 = vld [vmem:[%s881 + $0x8] sm:$0xff]
    %v884 = vld [vmem:[%s881 + $0x10] sm:$0xff]
    %v885 = vld [vmem:[%s881 + $0x18] sm:$0xff]
    %v886 = vpack.c.bf16 %v869, %v869
    %887 = vmatprep.subr.bf16.mxu0 %v462
    %888 = vmatpush1.bf16.msra.mxu0 %v461
    %889 = vmatprep.subr.bf16.mxu0 %v466
    %890 = vmatpush1.bf16.msra.mxu0 %v465
    %891 = vmatprep.subr.bf16.mxu0 %v470
    %892 = vmatpush1.bf16.msra.mxu0 %v469
    %893 = vmatprep.subr.bf16.mxu0 %v474
    %894 = vmatpush1.bf16.msra.mxu0 %v473
    %895 = vmatprep.subr.bf16.mxu0 %v478
    %896 = vmatpush1.bf16.msra.mxu0 %v477
    %897 = vmatprep.subr.bf16.mxu0 %v482
    %898 = vmatpush1.bf16.msra.mxu0 %v481
    %899 = vmatprep.subr.bf16.mxu0 %v486
    %900 = vmatpush1.bf16.msra.mxu0 %v485
    %901 = vmatprep.subr.bf16.mxu0 %v490
    %902 = vmatpush1.bf16.msra.mxu0 %v489
    %903 = vmatprep.subr.bf16.mxu0 0
    %904 = vmatpush1.bf16.msra.mxu0 0
    %905 = vmatprep.subr.bf16.mxu0 0
    %906 = vmatpush1.bf16.msra.mxu0 0
    %907 = vmatprep.subr.bf16.mxu0 0
    %908 = vmatpush1.bf16.msra.mxu0 0
    %909 = vmatprep.subr.bf16.mxu0 0
    %910 = vmatpush1.bf16.msra.mxu0 0
    %911 = vmatprep.subr.bf16.mxu0 0
    %912 = vmatpush1.bf16.msra.mxu0 0
    %913 = vmatprep.subr.bf16.mxu0 0
    %914 = vmatpush1.bf16.msra.mxu0 0
    %915 = vmatprep.subr.bf16.mxu0 0
    %916 = vmatpush1.bf16.msra.mxu0 0
    %917 = vmatprep.subr.bf16.mxu0 0
    %918 = vmatpush1.bf16.msra.mxu0 0
    %919 = vmatprep.mubr.bf16.mxu0 0
    %920 = vmatmul.mubr.bf16.gmra.mrb[0].mxu0 %v886
    %v921 = vpop.f32.mrb[0].mxu0
    %v922 = vadd.f32 0.0, %v921
    %v923 = vpop.f32.mrb[0].mxu0
    %v924 = vadd.f32 0.0, %v923
    %v925 = vpop.f32.mrb[0].mxu0
    %v926 = vpop.f32.mrb[0].mxu0
    %927 = vdwg.mxu0
    %928 = vmatprep.subr.bf16.mxu0 %v464
    %929 = vmatpush1.bf16.msra.mxu0 %v463
    %930 = vmatprep.subr.bf16.mxu0 %v468
    %931 = vmatpush1.bf16.msra.mxu0 %v467
    %932 = vmatprep.subr.bf16.mxu0 %v472
    %933 = vmatpush1.bf16.msra.mxu0 %v471
    %934 = vmatprep.subr.bf16.mxu0 %v476
    %935 = vmatpush1.bf16.msra.mxu0 %v475
    %936 = vmatprep.subr.bf16.mxu0 %v480
    %937 = vmatpush1.bf16.msra.mxu0 %v479
    %938 = vmatprep.subr.bf16.mxu0 %v484
    %939 = vmatpush1.bf16.msra.mxu0 %v483
    %940 = vmatprep.subr.bf16.mxu0 %v488
    %941 = vmatpush1.bf16.msra.mxu0 %v487
    %942 = vmatprep.subr.bf16.mxu0 %v492
    %943 = vmatpush1.bf16.msra.mxu0 %v491
    %944 = vmatprep.subr.bf16.mxu0 0
    %945 = vmatpush1.bf16.msra.mxu0 0
    %946 = vmatprep.subr.bf16.mxu0 0
    %947 = vmatpush1.bf16.msra.mxu0 0
    %948 = vmatprep.subr.bf16.mxu0 0
    %949 = vmatpush1.bf16.msra.mxu0 0
    %950 = vmatprep.subr.bf16.mxu0 0
    %951 = vmatpush1.bf16.msra.mxu0 0
    %952 = vmatprep.subr.bf16.mxu0 0
    %953 = vmatpush1.bf16.msra.mxu0 0
    %954 = vmatprep.subr.bf16.mxu0 0
    %955 = vmatpush1.bf16.msra.mxu0 0
    %956 = vmatprep.subr.bf16.mxu0 0
    %957 = vmatpush1.bf16.msra.mxu0 0
    %958 = vmatprep.subr.bf16.mxu0 0
    %959 = vmatpush1.bf16.msra.mxu0 0
    %960 = vmatprep.mubr.bf16.mxu0 0
    %961 = vmatmul.mubr.bf16.gmra.mrb[0].mxu0 %v886
    %v962 = vpop.f32.mrb[0].mxu0
    %v963 = vadd.f32 0.0, %v962
    %v964 = vpop.f32.mrb[0].mxu0
    %v965 = vadd.f32 0.0, %v964
    %v966 = vpop.f32.mrb[0].mxu0
    %v967 = vpop.f32.mrb[0].mxu0
    %968 = vdwg.mxu0
    %v969 = vadd.f32 %v882, %v922
    %v970 = vadd.f32 %v883, %v924
    %v971 = vadd.f32 %v884, %v963
    %v972 = vadd.f32 %v885, %v965
    %v973 = vmul.f32 %v969, 0.5
    %v974 = vtanh.pop %v973
    %v975 = vmul.f32 %v974, 0.5
    %v976 = vadd.f32 %v975, 0.5
    %v977 = vmul.f32 %v970, 0.5
    %v978 = vtanh.pop %v977
    %v979 = vmul.f32 %v978, 0.5
    %v980 = vadd.f32 %v979, 0.5
    %v981 = vtanh.pop %v971
    %v982 = vmul.f32 %v972, 0.5
    %v983 = vtanh.pop %v982
    %v984 = vmul.f32 %v983, 0.5
    %v985 = vadd.f32 %v984, 0.5
    %v986 = vmul.f32 %v980, %v867
    %v987 = vmul.f32 %v976, %v981
    %v988 = vadd.f32 %v986, %v987
    %v989 = vtanh.pop %v988
    %v990 = vmul.f32 %v985, %v989
    %s991 = sadd.s32 %s319, 3
    %v992 = vstv %s991
    %vm993 = vcmp.eq.s32.totalorder %v321, %v992
    %v994 = vsel %vm993, 1, 0
    %995 = vset.pattern.permute.xlu0 0
    %996 = vperm.xlu0 %995, %v994
    %v997 = vpop.permute.xlu0 %996
    %vm998 = vcmp.eq.s32.totalorder %v997, 1
    %v999 = vsel %vm998, %v990, %v878
    %s1000 = smul.u32 4, 4
    %s1001 = smul.addr %s1000, 8
    %s1002 = scalar_lea.vmem [#allocation5], %s1001
    %v1003 = vld [vmem:[%s1002] sm:$0xff]
    %v1004 = vld [vmem:[%s1002 + $0x8] sm:$0xff]
    %v1005 = vld [vmem:[%s1002 + $0x10] sm:$0xff]
    %v1006 = vld [vmem:[%s1002 + $0x18] sm:$0xff]
    %v1007 = vpack.c.bf16 %v990, %v990
    %1008 = vmatprep.subr.bf16.mxu0 %v462
    %1009 = vmatpush1.bf16.msra.mxu0 %v461
    %1010 = vmatprep.subr.bf16.mxu0 %v466
    %1011 = vmatpush1.bf16.msra.mxu0 %v465
    %1012 = vmatprep.subr.bf16.mxu0 %v470
    %1013 = vmatpush1.bf16.msra.mxu0 %v469
    %1014 = vmatprep.subr.bf16.mxu0 %v474
    %1015 = vmatpush1.bf16.msra.mxu0 %v473
    %1016 = vmatprep.subr.bf16.mxu0 %v478
    %1017 = vmatpush1.bf16.msra.mxu0 %v477
    %1018 = vmatprep.subr.bf16.mxu0 %v482
    %1019 = vmatpush1.bf16.msra.mxu0 %v481
    %1020 = vmatprep.subr.bf16.mxu0 %v486
    %1021 = vmatpush1.bf16.msra.mxu0 %v485
    %1022 = vmatprep.subr.bf16.mxu0 %v490
    %1023 = vmatpush1.bf16.msra.mxu0 %v489
    %1024 = vmatprep.subr.bf16.mxu0 0
    %1025 = vmatpush1.bf16.msra.mxu0 0
    %1026 = vmatprep.subr.bf16.mxu0 0
    %1027 = vmatpush1.bf16.msra.mxu0 0
    %1028 = vmatprep.subr.bf16.mxu0 0
    %1029 = vmatpush1.bf16.msra.mxu0 0
    %1030 = vmatprep.subr.bf16.mxu0 0
    %1031 = vmatpush1.bf16.msra.mxu0 0
    %1032 = vmatprep.subr.bf16.mxu0 0
    %1033 = vmatpush1.bf16.msra.mxu0 0
    %1034 = vmatprep.subr.bf16.mxu0 0
    %1035 = vmatpush1.bf16.msra.mxu0 0
    %1036 = vmatprep.subr.bf16.mxu0 0
    %1037 = vmatpush1.bf16.msra.mxu0 0
    %1038 = vmatprep.subr.bf16.mxu0 0
    %1039 = vmatpush1.bf16.msra.mxu0 0
    %1040 = vmatprep.mubr.bf16.mxu0 0
    %1041 = vmatmul.mubr.bf16.gmra.mrb[0].mxu0 %v1007
    %v1042 = vpop.f32.mrb[0].mxu0
    %v1043 = vadd.f32 0.0, %v1042
    %v1044 = vpop.f32.mrb[0].mxu0
    %v1045 = vadd.f32 0.0, %v1044
    %v1046 = vpop.f32.mrb[0].mxu0
    %v1047 = vpop.f32.mrb[0].mxu0
    %1048 = vdwg.mxu0
    %1049 = vmatprep.subr.bf16.mxu0 %v464
    %1050 = vmatpush1.bf16.msra.mxu0 %v463
    %1051 = vmatprep.subr.bf16.mxu0 %v468
    %1052 = vmatpush1.bf16.msra.mxu0 %v467
    %1053 = vmatprep.subr.bf16.mxu0 %v472
    %1054 = vmatpush1.bf16.msra.mxu0 %v471
    %1055 = vmatprep.subr.bf16.mxu0 %v476
    %1056 = vmatpush1.bf16.msra.mxu0 %v475
    %1057 = vmatprep.subr.bf16.mxu0 %v480
    %1058 = vmatpush1.bf16.msra.mxu0 %v479
    %1059 = vmatprep.subr.bf16.mxu0 %v484
    %1060 = vmatpush1.bf16.msra.mxu0 %v483
    %1061 = vmatprep.subr.bf16.mxu0 %v488
    %1062 = vmatpush1.bf16.msra.mxu0 %v487
    %1063 = vmatprep.subr.bf16.mxu0 %v492
    %1064 = vmatpush1.bf16.msra.mxu0 %v491
    %1065 = vmatprep.subr.bf16.mxu0 0
    %1066 = vmatpush1.bf16.msra.mxu0 0
    %1067 = vmatprep.subr.bf16.mxu0 0
    %1068 = vmatpush1.bf16.msra.mxu0 0
    %1069 = vmatprep.subr.bf16.mxu0 0
    %1070 = vmatpush1.bf16.msra.mxu0 0
    %1071 = vmatprep.subr.bf16.mxu0 0
    %1072 = vmatpush1.bf16.msra.mxu0 0
    %1073 = vmatprep.subr.bf16.mxu0 0
    %1074 = vmatpush1.bf16.msra.mxu0 0
    %1075 = vmatprep.subr.bf16.mxu0 0
    %1076 = vmatpush1.bf16.msra.mxu0 0
    %1077 = vmatprep.subr.bf16.mxu0 0
    %1078 = vmatpush1.bf16.msra.mxu0 0
    %1079 = vmatprep.subr.bf16.mxu0 0
    %1080 = vmatpush1.bf16.msra.mxu0 0
    %1081 = vmatprep.mubr.bf16.mxu0 0
    %1082 = vmatmul.mubr.bf16.gmra.mrb[0].mxu0 %v1007
    %v1083 = vpop.f32.mrb[0].mxu0
    %v1084 = vadd.f32 0.0, %v1083
    %v1085 = vpop.f32.mrb[0].mxu0
    %v1086 = vadd.f32 0.0, %v1085
    %v1087 = vpop.f32.mrb[0].mxu0
    %v1088 = vpop.f32.mrb[0].mxu0
    %1089 = vdwg.mxu0
    %v1090 = vadd.f32 %v1003, %v1043
    %v1091 = vadd.f32 %v1004, %v1045
    %v1092 = vadd.f32 %v1005, %v1084
    %v1093 = vadd.f32 %v1006, %v1086
    %v1094 = vmul.f32 %v1090, 0.5
    %v1095 = vtanh.pop %v1094
    %v1096 = vmul.f32 %v1095, 0.5
    %v1097 = vadd.f32 %v1096, 0.5
    %v1098 = vmul.f32 %v1091, 0.5
    %v1099 = vtanh.pop %v1098
    %v1100 = vmul.f32 %v1099, 0.5
    %v1101 = vadd.f32 %v1100, 0.5
    %v1102 = vtanh.pop %v1092
    %v1103 = vmul.f32 %v1093, 0.5
    %v1104 = vtanh.pop %v1103
    %v1105 = vmul.f32 %v1104, 0.5
    %v1106 = vadd.f32 %v1105, 0.5
    %v1107 = vmul.f32 %v1101, %v988
    %v1108 = vmul.f32 %v1097, %v1102
    %v1109 = vadd.f32 %v1107, %v1108
    %v1110 = vtanh.pop %v1109
    %v1111 = vmul.f32 %v1106, %v1110
    %s1112 = sadd.s32 %s319, 4
    %v1113 = vstv %s1112
    %vm1114 = vcmp.eq.s32.totalorder %v321, %v1113
    %v1115 = vsel %vm1114, 1, 0
    %1116 = vset.pattern.permute.xlu0 0
    %1117 = vperm.xlu0 %1116, %v1115
    %v1118 = vpop.permute.xlu0 %1117
    %vm1119 = vcmp.eq.s32.totalorder %v1118, 1
    %v1120 = vsel %vm1119, %v1111, %v999
    %s1121 = smul.u32 5, 4
    %s1122 = smul.addr %s1121, 8
    %s1123 = scalar_lea.vmem [#allocation5], %s1122
    %v1124 = vld [vmem:[%s1123] sm:$0xff]
    %v1125 = vld [vmem:[%s1123 + $0x8] sm:$0xff]
    %v1126 = vld [vmem:[%s1123 + $0x10] sm:$0xff]
    %v1127 = vld [vmem:[%s1123 + $0x18] sm:$0xff]
    %v1128 = vpack.c.bf16 %v1111, %v1111
    %1129 = vmatprep.subr.bf16.mxu0 %v462
    %1130 = vmatpush1.bf16.msra.mxu0 %v461
    %1131 = vmatprep.subr.bf16.mxu0 %v466
    %1132 = vmatpush1.bf16.msra.mxu0 %v465
    %1133 = vmatprep.subr.bf16.mxu0 %v470
    %1134 = vmatpush1.bf16.msra.mxu0 %v469
    %1135 = vmatprep.subr.bf16.mxu0 %v474
    %1136 = vmatpush1.bf16.msra.mxu0 %v473
    %1137 = vmatprep.subr.bf16.mxu0 %v478
    %1138 = vmatpush1.bf16.msra.mxu0 %v477
    %1139 = vmatprep.subr.bf16.mxu0 %v482
    %1140 = vmatpush1.bf16.msra.mxu0 %v481
    %1141 = vmatprep.subr.bf16.mxu0 %v486
    %1142 = vmatpush1.bf16.msra.mxu0 %v485
    %1143 = vmatprep.subr.bf16.mxu0 %v490
    %1144 = vmatpush1.bf16.msra.mxu0 %v489
    %1145 = vmatprep.subr.bf16.mxu0 0
    %1146 = vmatpush1.bf16.msra.mxu0 0
    %1147 = vmatprep.subr.bf16.mxu0 0
    %1148 = vmatpush1.bf16.msra.mxu0 0
    %1149 = vmatprep.subr.bf16.mxu0 0
    %1150 = vmatpush1.bf16.msra.mxu0 0
    %1151 = vmatprep.subr.bf16.mxu0 0
    %1152 = vmatpush1.bf16.msra.mxu0 0
    %1153 = vmatprep.subr.bf16.mxu0 0
    %1154 = vmatpush1.bf16.msra.mxu0 0
    %1155 = vmatprep.subr.bf16.mxu0 0
    %1156 = vmatpush1.bf16.msra.mxu0 0
    %1157 = vmatprep.subr.bf16.mxu0 0
    %1158 = vmatpush1.bf16.msra.mxu0 0
    %1159 = vmatprep.subr.bf16.mxu0 0
    %1160 = vmatpush1.bf16.msra.mxu0 0
    %1161 = vmatprep.mubr.bf16.mxu0 0
    %1162 = vmatmul.mubr.bf16.gmra.mrb[0].mxu0 %v1128
    %v1163 = vpop.f32.mrb[0].mxu0
    %v1164 = vadd.f32 0.0, %v1163
    %v1165 = vpop.f32.mrb[0].mxu0
    %v1166 = vadd.f32 0.0, %v1165
    %v1167 = vpop.f32.mrb[0].mxu0
    %v1168 = vpop.f32.mrb[0].mxu0
    %1169 = vdwg.mxu0
    %1170 = vmatprep.subr.bf16.mxu0 %v464
    %1171 = vmatpush1.bf16.msra.mxu0 %v463
    %1172 = vmatprep.subr.bf16.mxu0 %v468
    %1173 = vmatpush1.bf16.msra.mxu0 %v467
    %1174 = vmatprep.subr.bf16.mxu0 %v472
    %1175 = vmatpush1.bf16.msra.mxu0 %v471
    %1176 = vmatprep.subr.bf16.mxu0 %v476
    %1177 = vmatpush1.bf16.msra.mxu0 %v475
    %1178 = vmatprep.subr.bf16.mxu0 %v480
    %1179 = vmatpush1.bf16.msra.mxu0 %v479
    %1180 = vmatprep.subr.bf16.mxu0 %v484
    %1181 = vmatpush1.bf16.msra.mxu0 %v483
    %1182 = vmatprep.subr.bf16.mxu0 %v488
    %1183 = vmatpush1.bf16.msra.mxu0 %v487
    %1184 = vmatprep.subr.bf16.mxu0 %v492
    %1185 = vmatpush1.bf16.msra.mxu0 %v491
    %1186 = vmatprep.subr.bf16.mxu0 0
    %1187 = vmatpush1.bf16.msra.mxu0 0
    %1188 = vmatprep.subr.bf16.mxu0 0
    %1189 = vmatpush1.bf16.msra.mxu0 0
    %1190 = vmatprep.subr.bf16.mxu0 0
    %1191 = vmatpush1.bf16.msra.mxu0 0
    %1192 = vmatprep.subr.bf16.mxu0 0
    %1193 = vmatpush1.bf16.msra.mxu0 0
    %1194 = vmatprep.subr.bf16.mxu0 0
    %1195 = vmatpush1.bf16.msra.mxu0 0
    %1196 = vmatprep.subr.bf16.mxu0 0
    %1197 = vmatpush1.bf16.msra.mxu0 0
    %1198 = vmatprep.subr.bf16.mxu0 0
    %1199 = vmatpush1.bf16.msra.mxu0 0
    %1200 = vmatprep.subr.bf16.mxu0 0
    %1201 = vmatpush1.bf16.msra.mxu0 0
    %1202 = vmatprep.mubr.bf16.mxu0 0
    %1203 = vmatmul.mubr.bf16.gmra.mrb[0].mxu0 %v1128
    %v1204 = vpop.f32.mrb[0].mxu0
    %v1205 = vadd.f32 0.0, %v1204
    %v1206 = vpop.f32.mrb[0].mxu0
    %v1207 = vadd.f32 0.0, %v1206
    %v1208 = vpop.f32.mrb[0].mxu0
    %v1209 = vpop.f32.mrb[0].mxu0
    %1210 = vdwg.mxu0
    %v1211 = vadd.f32 %v1124, %v1164
    %v1212 = vadd.f32 %v1125, %v1166
    %v1213 = vadd.f32 %v1126, %v1205
    %v1214 = vadd.f32 %v1127, %v1207
    %v1215 = vmul.f32 %v1211, 0.5
    %v1216 = vtanh.pop %v1215
    %v1217 = vmul.f32 %v1216, 0.5
    %v1218 = vadd.f32 %v1217, 0.5
    %v1219 = vmul.f32 %v1212, 0.5
    %v1220 = vtanh.pop %v1219
    %v1221 = vmul.f32 %v1220, 0.5
    %v1222 = vadd.f32 %v1221, 0.5
    %v1223 = vtanh.pop %v1213
    %v1224 = vmul.f32 %v1214, 0.5
    %v1225 = vtanh.pop %v1224
    %v1226 = vmul.f32 %v1225, 0.5
    %v1227 = vadd.f32 %v1226, 0.5
    %v1228 = vmul.f32 %v1222, %v1109
    %v1229 = vmul.f32 %v1218, %v1223
    %v1230 = vadd.f32 %v1228, %v1229
    %v1231 = vtanh.pop %v1230
    %v1232 = vmul.f32 %v1227, %v1231
    %s1233 = sadd.s32 %s319, 5
    %v1234 = vstv %s1233
    %vm1235 = vcmp.eq.s32.totalorder %v321, %v1234
    %v1236 = vsel %vm1235, 1, 0
    %1237 = vset.pattern.permute.xlu0 0
    %1238 = vperm.xlu0 %1237, %v1236
    %v1239 = vpop.permute.xlu0 %1238
    %vm1240 = vcmp.eq.s32.totalorder %v1239, 1
    %v1241 = vsel %vm1240, %v1232, %v1120
    %s1242 = smul.u32 6, 4
    %s1243 = smul.addr %s1242, 8
    %s1244 = scalar_lea.vmem [#allocation5], %s1243
    %v1245 = vld [vmem:[%s1244] sm:$0xff]
    %v1246 = vld [vmem:[%s1244 + $0x8] sm:$0xff]
    %v1247 = vld [vmem:[%s1244 + $0x10] sm:$0xff]
    %v1248 = vld [vmem:[%s1244 + $0x18] sm:$0xff]
    %v1249 = vpack.c.bf16 %v1232, %v1232
    %1250 = vmatprep.subr.bf16.mxu0 %v462
    %1251 = vmatpush1.bf16.msra.mxu0 %v461
    %1252 = vmatprep.subr.bf16.mxu0 %v466
    %1253 = vmatpush1.bf16.msra.mxu0 %v465
    %1254 = vmatprep.subr.bf16.mxu0 %v470
    %1255 = vmatpush1.bf16.msra.mxu0 %v469
    %1256 = vmatprep.subr.bf16.mxu0 %v474
    %1257 = vmatpush1.bf16.msra.mxu0 %v473
    %1258 = vmatprep.subr.bf16.mxu0 %v478
    %1259 = vmatpush1.bf16.msra.mxu0 %v477
    %1260 = vmatprep.subr.bf16.mxu0 %v482
    %1261 = vmatpush1.bf16.msra.mxu0 %v481
    %1262 = vmatprep.subr.bf16.mxu0 %v486
    %1263 = vmatpush1.bf16.msra.mxu0 %v485
    %1264 = vmatprep.subr.bf16.mxu0 %v490
    %1265 = vmatpush1.bf16.msra.mxu0 %v489
    %1266 = vmatprep.subr.bf16.mxu0 0
    %1267 = vmatpush1.bf16.msra.mxu0 0
    %1268 = vmatprep.subr.bf16.mxu0 0
    %1269 = vmatpush1.bf16.msra.mxu0 0
    %1270 = vmatprep.subr.bf16.mxu0 0
    %1271 = vmatpush1.bf16.msra.mxu0 0
    %1272 = vmatprep.subr.bf16.mxu0 0
    %1273 = vmatpush1.bf16.msra.mxu0 0
    %1274 = vmatprep.subr.bf16.mxu0 0
    %1275 = vmatpush1.bf16.msra.mxu0 0
    %1276 = vmatprep.subr.bf16.mxu0 0
    %1277 = vmatpush1.bf16.msra.mxu0 0
    %1278 = vmatprep.subr.bf16.mxu0 0
    %1279 = vmatpush1.bf16.msra.mxu0 0
    %1280 = vmatprep.subr.bf16.mxu0 0
    %1281 = vmatpush1.bf16.msra.mxu0 0
    %1282 = vmatprep.mubr.bf16.mxu0 0
    %1283 = vmatmul.mubr.bf16.gmra.mrb[0].mxu0 %v1249
    %v1284 = vpop.f32.mrb[0].mxu0
    %v1285 = vadd.f32 0.0, %v1284
    %v1286 = vpop.f32.mrb[0].mxu0
    %v1287 = vadd.f32 0.0, %v1286
    %v1288 = vpop.f32.mrb[0].mxu0
    %v1289 = vpop.f32.mrb[0].mxu0
    %1290 = vdwg.mxu0
    %1291 = vmatprep.subr.bf16.mxu0 %v464
    %1292 = vmatpush1.bf16.msra.mxu0 %v463
    %1293 = vmatprep.subr.bf16.mxu0 %v468
    %1294 = vmatpush1.bf16.msra.mxu0 %v467
    %1295 = vmatprep.subr.bf16.mxu0 %v472
    %1296 = vmatpush1.bf16.msra.mxu0 %v471
    %1297 = vmatprep.subr.bf16.mxu0 %v476
    %1298 = vmatpush1.bf16.msra.mxu0 %v475
    %1299 = vmatprep.subr.bf16.mxu0 %v480
    %1300 = vmatpush1.bf16.msra.mxu0 %v479
    %1301 = vmatprep.subr.bf16.mxu0 %v484
    %1302 = vmatpush1.bf16.msra.mxu0 %v483
    %1303 = vmatprep.subr.bf16.mxu0 %v488
    %1304 = vmatpush1.bf16.msra.mxu0 %v487
    %1305 = vmatprep.subr.bf16.mxu0 %v492
    %1306 = vmatpush1.bf16.msra.mxu0 %v491
    %1307 = vmatprep.subr.bf16.mxu0 0
    %1308 = vmatpush1.bf16.msra.mxu0 0
    %1309 = vmatprep.subr.bf16.mxu0 0
    %1310 = vmatpush1.bf16.msra.mxu0 0
    %1311 = vmatprep.subr.bf16.mxu0 0
    %1312 = vmatpush1.bf16.msra.mxu0 0
    %1313 = vmatprep.subr.bf16.mxu0 0
    %1314 = vmatpush1.bf16.msra.mxu0 0
    %1315 = vmatprep.subr.bf16.mxu0 0
    %1316 = vmatpush1.bf16.msra.mxu0 0
    %1317 = vmatprep.subr.bf16.mxu0 0
    %1318 = vmatpush1.bf16.msra.mxu0 0
    %1319 = vmatprep.subr.bf16.mxu0 0
    %1320 = vmatpush1.bf16.msra.mxu0 0
    %1321 = vmatprep.subr.bf16.mxu0 0
    %1322 = vmatpush1.bf16.msra.mxu0 0
    %1323 = vmatprep.mubr.bf16.mxu0 0
    %1324 = vmatmul.mubr.bf16.gmra.mrb[0].mxu0 %v1249
    %v1325 = vpop.f32.mrb[0].mxu0
    %v1326 = vadd.f32 0.0, %v1325
    %v1327 = vpop.f32.mrb[0].mxu0
    %v1328 = vadd.f32 0.0, %v1327
    %v1329 = vpop.f32.mrb[0].mxu0
    %v1330 = vpop.f32.mrb[0].mxu0
    %1331 = vdwg.mxu0
    %v1332 = vadd.f32 %v1245, %v1285
    %v1333 = vadd.f32 %v1246, %v1287
    %v1334 = vadd.f32 %v1247, %v1326
    %v1335 = vadd.f32 %v1248, %v1328
    %v1336 = vmul.f32 %v1332, 0.5
    %v1337 = vtanh.pop %v1336
    %v1338 = vmul.f32 %v1337, 0.5
    %v1339 = vadd.f32 %v1338, 0.5
    %v1340 = vmul.f32 %v1333, 0.5
    %v1341 = vtanh.pop %v1340
    %v1342 = vmul.f32 %v1341, 0.5
    %v1343 = vadd.f32 %v1342, 0.5
    %v1344 = vtanh.pop %v1334
    %v1345 = vmul.f32 %v1335, 0.5
    %v1346 = vtanh.pop %v1345
    %v1347 = vmul.f32 %v1346, 0.5
    %v1348 = vadd.f32 %v1347, 0.5
    %v1349 = vmul.f32 %v1343, %v1230
    %v1350 = vmul.f32 %v1339, %v1344
    %v1351 = vadd.f32 %v1349, %v1350
    %v1352 = vtanh.pop %v1351
    %v1353 = vmul.f32 %v1348, %v1352
    %s1354 = sadd.s32 %s319, 6
    %v1355 = vstv %s1354
    %vm1356 = vcmp.eq.s32.totalorder %v321, %v1355
    %v1357 = vsel %vm1356, 1, 0
    %1358 = vset.pattern.permute.xlu0 0
    %1359 = vperm.xlu0 %1358, %v1357
    %v1360 = vpop.permute.xlu0 %1359
    %vm1361 = vcmp.eq.s32.totalorder %v1360, 1
    %v1362 = vsel %vm1361, %v1353, %v1241
    %s1363 = smul.u32 7, 4
    %s1364 = smul.addr %s1363, 8
    %s1365 = scalar_lea.vmem [#allocation5], %s1364
    %v1366 = vld [vmem:[%s1365] sm:$0xff]
    %v1367 = vld [vmem:[%s1365 + $0x8] sm:$0xff]
    %v1368 = vld [vmem:[%s1365 + $0x10] sm:$0xff]
    %v1369 = vld [vmem:[%s1365 + $0x18] sm:$0xff]
    %v1370 = vpack.c.bf16 %v1353, %v1353
    %1371 = vmatprep.subr.bf16.mxu0 %v462
    %1372 = vmatpush1.bf16.msra.mxu0 %v461
    %1373 = vmatprep.subr.bf16.mxu0 %v466
    %1374 = vmatpush1.bf16.msra.mxu0 %v465
    %1375 = vmatprep.subr.bf16.mxu0 %v470
    %1376 = vmatpush1.bf16.msra.mxu0 %v469
    %1377 = vmatprep.subr.bf16.mxu0 %v474
    %1378 = vmatpush1.bf16.msra.mxu0 %v473
    %1379 = vmatprep.subr.bf16.mxu0 %v478
    %1380 = vmatpush1.bf16.msra.mxu0 %v477
    %1381 = vmatprep.subr.bf16.mxu0 %v482
    %1382 = vmatpush1.bf16.msra.mxu0 %v481
    %1383 = vmatprep.subr.bf16.mxu0 %v486
    %1384 = vmatpush1.bf16.msra.mxu0 %v485
    %1385 = vmatprep.subr.bf16.mxu0 %v490
    %1386 = vmatpush1.bf16.msra.mxu0 %v489
    %1387 = vmatprep.subr.bf16.mxu0 0
    %1388 = vmatpush1.bf16.msra.mxu0 0
    %1389 = vmatprep.subr.bf16.mxu0 0
    %1390 = vmatpush1.bf16.msra.mxu0 0
    %1391 = vmatprep.subr.bf16.mxu0 0
    %1392 = vmatpush1.bf16.msra.mxu0 0
    %1393 = vmatprep.subr.bf16.mxu0 0
    %1394 = vmatpush1.bf16.msra.mxu0 0
    %1395 = vmatprep.subr.bf16.mxu0 0
    %1396 = vmatpush1.bf16.msra.mxu0 0
    %1397 = vmatprep.subr.bf16.mxu0 0
    %1398 = vmatpush1.bf16.msra.mxu0 0
    %1399 = vmatprep.subr.bf16.mxu0 0
    %1400 = vmatpush1.bf16.msra.mxu0 0
    %1401 = vmatprep.subr.bf16.mxu0 0
    %1402 = vmatpush1.bf16.msra.mxu0 0
    %1403 = vmatprep.mubr.bf16.mxu0 0
    %1404 = vmatmul.mubr.bf16.gmra.mrb[0].mxu0 %v1370
    %v1405 = vpop.f32.mrb[0].mxu0
    %v1406 = vadd.f32 0.0, %v1405
    %v1407 = vpop.f32.mrb[0].mxu0
    %v1408 = vadd.f32 0.0, %v1407
    %v1409 = vpop.f32.mrb[0].mxu0
    %v1410 = vpop.f32.mrb[0].mxu0
    %1411 = vdwg.mxu0
    %1412 = vmatprep.subr.bf16.mxu0 %v464
    %1413 = vmatpush1.bf16.msra.mxu0 %v463
    %1414 = vmatprep.subr.bf16.mxu0 %v468
    %1415 = vmatpush1.bf16.msra.mxu0 %v467
    %1416 = vmatprep.subr.bf16.mxu0 %v472
    %1417 = vmatpush1.bf16.msra.mxu0 %v471
    %1418 = vmatprep.subr.bf16.mxu0 %v476
    %1419 = vmatpush1.bf16.msra.mxu0 %v475
    %1420 = vmatprep.subr.bf16.mxu0 %v480
    %1421 = vmatpush1.bf16.msra.mxu0 %v479
    %1422 = vmatprep.subr.bf16.mxu0 %v484
    %1423 = vmatpush1.bf16.msra.mxu0 %v483
    %1424 = vmatprep.subr.bf16.mxu0 %v488
    %1425 = vmatpush1.bf16.msra.mxu0 %v487
    %1426 = vmatprep.subr.bf16.mxu0 %v492
    %1427 = vmatpush1.bf16.msra.mxu0 %v491
    %1428 = vmatprep.subr.bf16.mxu0 0
    %1429 = vmatpush1.bf16.msra.mxu0 0
    %1430 = vmatprep.subr.bf16.mxu0 0
    %1431 = vmatpush1.bf16.msra.mxu0 0
    %1432 = vmatprep.subr.bf16.mxu0 0
    %1433 = vmatpush1.bf16.msra.mxu0 0
    %1434 = vmatprep.subr.bf16.mxu0 0
    %1435 = vmatpush1.bf16.msra.mxu0 0
    %1436 = vmatprep.subr.bf16.mxu0 0
    %1437 = vmatpush1.bf16.msra.mxu0 0
    %1438 = vmatprep.subr.bf16.mxu0 0
    %1439 = vmatpush1.bf16.msra.mxu0 0
    %1440 = vmatprep.subr.bf16.mxu0 0
    %1441 = vmatpush1.bf16.msra.mxu0 0
    %1442 = vmatprep.subr.bf16.mxu0 0
    %1443 = vmatpush1.bf16.msra.mxu0 0
    %1444 = vmatprep.mubr.bf16.mxu0 0
    %1445 = vmatmul.mubr.bf16.gmra.mrb[0].mxu0 %v1370
    %v1446 = vpop.f32.mrb[0].mxu0
    %v1447 = vadd.f32 0.0, %v1446
    %v1448 = vpop.f32.mrb[0].mxu0
    %v1449 = vadd.f32 0.0, %v1448
    %v1450 = vpop.f32.mrb[0].mxu0
    %v1451 = vpop.f32.mrb[0].mxu0
    %1452 = vdwg.mxu0
    %v1453 = vadd.f32 %v1366, %v1406
    %v1454 = vadd.f32 %v1367, %v1408
    %v1455 = vadd.f32 %v1368, %v1447
    %v1456 = vadd.f32 %v1369, %v1449
    %v1457 = vmul.f32 %v1453, 0.5
    %v1458 = vtanh.pop %v1457
    %v1459 = vmul.f32 %v1458, 0.5
    %v1460 = vadd.f32 %v1459, 0.5
    %v1461 = vmul.f32 %v1454, 0.5
    %v1462 = vtanh.pop %v1461
    %v1463 = vmul.f32 %v1462, 0.5
    %v1464 = vadd.f32 %v1463, 0.5
    %v1465 = vtanh.pop %v1455
    %v1466 = vmul.f32 %v1456, 0.5
    %v1467 = vtanh.pop %v1466
    %v1468 = vmul.f32 %v1467, 0.5
    %v1469 = vadd.f32 %v1468, 0.5
    %v1470 = vmul.f32 %v1464, %v1351
    %v1471 = vmul.f32 %v1460, %v1465
    %v1472 = vadd.f32 %v1470, %v1471
    %v1473 = vtanh.pop %v1472
    %v1474 = vmul.f32 %v1469, %v1473
    %s1475 = sadd.s32 %s319, 7
    %v1476 = vstv %s1475
    %vm1477 = vcmp.eq.s32.totalorder %v321, %v1476
    %v1478 = vsel %vm1477, 1, 0
    %1479 = vset.pattern.permute.xlu0 0
    %1480 = vperm.xlu0 %1479, %v1478
    %v1481 = vpop.permute.xlu0 %1480
    %vm1482 = vcmp.eq.s32.totalorder %v1481, 1
    %v1483 = vsel %vm1482, %v1474, %v1362
    %1484 = vst [vmem:[#allocation2] sm:$0xff] %v1474
    %1485 = vst [vmem:[#allocation3] sm:$0xff] %v1472
    %1486 = vst [vmem:[#allocation4] sm:$0xff] %v1483
    // Predicated region
    $region38: #{tpu_custom_call.1} parent=1 // pred_check
      %p1487 = pneg %p63
    $region39: #{tpu_custom_call.1} parent=1 // pred_check_branch
      %1489 = sbr.rel (%p1487) target = $region41
    $region40: #{tpu_custom_call.1} parent=1 // pred_region
      %1490 = vst [vmem:[#allocation12] sm:$0xff] %v1483
    $region41: #{tpu_custom_call.1} parent=1 // pred_fallthru
      _
    // Predicated region
    $region42: #{tpu_custom_call.1} parent=1 // pred_check
      _
    $region43: #{tpu_custom_call.1} parent=1 // pred_check_branch
      %1492 = sbr.rel (0) target = $region45
    $region44: #{tpu_custom_call.1} parent=1 // pred_region
      %s1494 = ssub.s32 128, 128
      %1495 = vsyncadd [#allocation8], %s1494
      %s1497 = sshll.u32 [#allocation12], 4
      %s1498 = int_to_ptr.vmem [resolvable:$true] %s1497
      %1500 = dma.vmem_to_hbm [thread:$0]  %s1498, 128, %s5, [#allocation8]
    $region45: #{tpu_custom_call.1} parent=1 // pred_fallthru
      _
    // Predicated region
    $region46: #{tpu_custom_call.1} parent=1 // pred_check
      _
    $region47: #{tpu_custom_call.1} parent=1 // pred_check_branch
      %1502 = sbr.rel (0) target = $region49
    $region48: #{tpu_custom_call.1} parent=1 // pred_region
      %1503 = dma.done [#allocation8], 128
    $region49: #{tpu_custom_call.1} parent=1 // pred_fallthru
      _
    %1504 = vsyncpa [#allocation7], 1
    %1505 = vsyncpa [#allocation10], 1
    %1506 = vsyncpa [#allocation8], 1

</llo_original>
